<compile_context>
chip_gen: v5e
topology: v5e:2x2
jax: 0.10.0
libtpu: 0.0.40
codegen_flags: <defaults>
</compile_context>

<pallas_src>
import jax
import jax.numpy as jnp
from jax.experimental import pallas as pl
from jax.experimental.pallas import tpu as pltpu

BN_EPS = 1e-5
BN0_SCALE = float((1.0 + BN_EPS) ** -0.5)   # inference-mode BatchNorm2d(1), init_bn


# --------------------------------------------------------------------------
# Weight preprocessing (plain JAX, runs once outside the kernel)
# --------------------------------------------------------------------------

def _conv3x3_to_banded(w, F):
    """HWIO (3,3,Cin,Cout) conv weight -> banded matmul weight (3*F*Cin, F*Cout).

    Rows are ordered (dy, fi, ci): row block [dy*F*Cin, (dy+1)*F*Cin) is the
    weight for the temporal tap x[t + dy - 1].  Columns are (fo*Cout + co).
    """
    Cin, Cout = w.shape[2], w.shape[3]
    fi = jnp.arange(F)[:, None]            # input freq bin
    fo = jnp.arange(F)[None, :]            # output freq bin
    dx = fi - fo + 1                       # kernel column index
    valid = ((dx >= 0) & (dx <= 2)).astype(w.dtype)
    dxc = jnp.clip(dx, 0, 2)
    Wd = w[:, dxc, :, :]                   # (3, fi, fo, Cin, Cout)
    Wd = Wd * valid[None, :, :, None, None]
    Wd = jnp.transpose(Wd, (0, 1, 3, 2, 4))          # (dy, fi, ci, fo, co)
    return Wd.reshape(3 * F * Cin, F * Cout)


def _make_pool_matrix(F, C):
    """avg_pool2d(kernel=(1,2)) over frequency, as a (F*C, (F//2)*C) matmul."""
    m_f = (jnp.arange(F)[:, None] // 2 == jnp.arange(F // 2)[None, :])
    m_f = m_f.astype(jnp.float32)
    eye_c = jnp.eye(C, dtype=jnp.float32)
    return 0.5 * jnp.einsum("fg,cd->fcgd", m_f, eye_c).reshape(F * C, (F // 2) * C)


def _prepare_fused_params(params, blocks_num):
    """Fold BN + Bn0 into banded conv weights, permute/stack FiLM weights."""
    fused = []
    for i, p in enumerate(params["blocks"]):
        F, Cin, C = p["fsize"], p["in_ch"], p["out_ch"]
        w1 = p["w1"] * (BN0_SCALE if i == 0 else 1.0)        # fold Bn0 into conv1 of block 0
        W1 = _conv3x3_to_banded(w1, F) * jnp.tile(p["s1"], F)[None, :]
        b1 = jnp.tile(p["h1"], F)[None, :]
        W2 = _conv3x3_to_banded(p["w2"], F) * jnp.tile(p["s2"], F)[None, :]
        b2 = jnp.tile(p["h2"], F)[None, :]
        # FiLM linear columns: PyTorch order is c*F + f; permute to f*C + c so the
        # (BB, F*C) result broadcasts directly over the lane-dense activation.
        perm = (jnp.arange(F)[:, None] + F * jnp.arange(C)[None, :]).reshape(-1)
        wf = jnp.concatenate([p["wg"][:, perm], p["wb"][:, perm]], axis=1)   # (D, 2*F*C)
        bf = jnp.concatenate([p["bg"][perm], p["bb"][perm]])[None, :]        # (1, 2*F*C)
        blk = {"W1": W1, "b1": b1, "W2": W2, "b2": b2, "wf": wf, "bf": bf,
               "F": F, "Cin": Cin, "C": C}
        if i < blocks_num:
            blk["pool"] = _make_pool_matrix(F, C)
        fused.append(blk)
    return fused


# --------------------------------------------------------------------------
# Fused encoder kernel
# --------------------------------------------------------------------------

def _make_encoder_kernel(plan, BB, T, blocks_num):
    """One grid step processes BB batch elements; activations are (BB*T, F*C)."""
    BBT = BB * T
    n_blocks = blocks_num + 1
    film_base = plan["film_base"]
    film_total = plan["film_total"]

    def kernel(x_ref, cond_ref, w_ref, bias_ref, wf_ref, *rest):
        if blocks_num > 0:
            pool_ref, out_refs = rest[0], rest[1:]
        else:
            pool_ref, out_refs = None, rest

        h = x_ref[0]                         # (BBT, F0*Cin0)
        cond = cond_ref[0]                   # (BB, D)

        # Hoisted batch-boundary masks for the temporal halo (built once).
        t_idx = jax.lax.broadcasted_iota(jnp.int32, (BBT, 1), 0)
        keep_up = (t_idx % T) != 0
        keep_dn = (t_idx % T) != (T - 1)

        # All FiLM gamma|beta projections for all blocks as ONE stacked matmul.
        gb = jnp.dot(cond, wf_ref[...], preferred_element_type=jnp.float32)
        gb = gb + bias_ref[0:1, film_base:film_base + film_total]   # (BB, film_total)

        def shifted_up(hh):
            z = jnp.zeros((1, hh.shape[1]), jnp.float32)
            s = jnp.concatenate([z, hh[:BBT - 1, :]], axis=0)       # s[t] = hh[t-1]
            return jnp.where(keep_up, s, 0.0)

        def shifted_dn(hh):
            z = jnp.zeros((1, hh.shape[1]), jnp.float32)
            s = jnp.concatenate([hh[1:, :], z], axis=0)             # s[t] = hh[t+1]
            return jnp.where(keep_dn, s, 0.0)

        def conv_stage(hh, row0, K, bcol, FCout):
            # 3x3 conv (frequency band folded into the weight) = 3 temporal-tap matmuls.
            Wu = w_ref[row0:row0 + K, 0:FCout]
            Wc = w_ref[row0 + K:row0 + 2 * K, 0:FCout]
            Wd = w_ref[row0 + 2 * K:row0 + 3 * K, 0:FCout]
            y = (jnp.dot(shifted_up(hh), Wu, preferred_element_type=jnp.float32)
                 + jnp.dot(hh, Wc, preferred_element_type=jnp.float32)
                 + jnp.dot(shifted_dn(hh), Wd, preferred_element_type=jnp.float32))
            y = y + bias_ref[0:1, bcol:bcol + FCout]                # fused BN affine
            return jnp.maximum(y, 0.0)

        def expand_rows(m):
            # (BB, X) -> each row repeated T times; exact, pure data movement.
            if BB == 1:
                return m                                            # broadcasts over rows
            parts = [jnp.broadcast_to(m[b:b + 1, :], (T, m.shape[1])) for b in range(BB)]
            return jnp.concatenate(parts, axis=0)

        for i in range(n_blocks):
            blk = plan["blocks"][i]
            FC = blk["FC"]
            # DeepConvBlock (two fused conv3x3 + BN + ReLU stages).
            h = conv_stage(h, blk["w1_row"], blk["K1"], blk["b1_col"], FC)
            h = conv_stage(h, blk["w2_row"], blk["K2"], blk["b2_col"], FC)
            # FiLM: per-batch gamma/beta, broadcast over the T rows of each element.
            off = blk["film_col"]
            ge = expand_rows(gb[:, off:off + 2 * FC])
            h = h * ge[:, 0:FC] + ge[:, FC:2 * FC]
            # Lane-dense output store: flatten (T, FC) into T*FC lanes via static
            # slices + lane concats, then ONE full-width (>=128-multiple) store.
            rows = []
            for b in range(BB):
                rows.append(jnp.concatenate(
                    [h[b * T + t:b * T + t + 1, :] for t in range(T)], axis=-1))
            flat = rows[0] if BB == 1 else jnp.concatenate(rows, axis=0)  # (BB, T*FC)
            out_refs[i][...] = flat[None].astype(out_refs[i].dtype)
            # avg_pool2d(kernel=(1,2)) over frequency as a tiny constant matmul.
            if i < blocks_num:
                FCh = FC // 2
                pm = pool_ref[0:blk["pool_rows"], blk["pool_col"]:blk["pool_col"] + FCh]
                h = jnp.dot(h, pm, preferred_element_type=jnp.float32)

    return kernel


def _pick_num_steps(B):
    # 2-TC chips (v4 / v5p / v7x): two "parallel" grid steps, one half-batch per
    # TensorCore.  Single-TC chips (v5e / v6e): one step avoids the fixed
    # per-step pipeline overhead.  Detection failure falls back to 1 (safe).
    if B < 2 or B % 2 != 0:
        return 1
    try:
        kind = jax.devices()[0].device_kind.lower()
    except Exception:
        kind = ""
    if ("v7" in kind) or ("v4" in kind) or ("v5p" in kind):
        return 2
    return 1


def encoder_forward_pallas(x_nchw, cond, params, blocks_num):
    """x_nchw: [B, Cin, T, F]; cond: [B, D].  Returns (x, concat_tensors) in NCHW."""
    B, Cin0, T, F0 = x_nchw.shape
    D = cond.shape[1]
    fused = _prepare_fused_params(params, blocks_num)
    n_blocks = blocks_num + 1

    num_steps = _pick_num_steps(B)
    BB = B // num_steps
    BBT = BB * T

    # ---- pack every small weight/bias/pool tensor into a few slabs -----------
    max_w = max(int(blk["W1"].shape[1]) for blk in fused)     # output lane width
    w_parts, bias_parts, film_b_parts, film_w_parts, pool_parts = [], [], [], [], []
    plan = {"blocks": []}
    row = col = fcol = pcol = 0
    pool_rows_max = max([int(fused[i]["pool"].shape[0]) for i in range(blocks_num)],
                        default=1)
    for i, blk in enumerate(fused):
        FC = int(blk["W1"].shape[1])
        K1 = int(blk["W1"].shape[0]) // 3
        K2 = int(blk["W2"].shape[0]) // 3
        pad = lambda w: jnp.pad(w, ((0, 0), (0, max_w - w.shape[1])))
        w_parts += [pad(blk["W1"]), pad(blk["W2"])]
        bias_parts += [blk["b1"], blk["b2"]]
        film_w_parts.append(blk["wf"])
        film_b_parts.append(blk["bf"])
        entry = {"FC": FC, "K1": K1, "K2": K2,
                 "w1_row": row, "w2_row": row + 3 * K1,
                 "b1_col": col, "b2_col": col + FC, "film_col": fcol}
        row += 3 * (K1 + K2)
        col += 2 * FC
        fcol += 2 * FC
        if i < blocks_num:
            pm = blk["pool"]
            pool_parts.append(jnp.pad(pm, ((0, pool_rows_max - pm.shape[0]), (0, 0))))
            entry["pool_col"] = pcol
            entry["pool_rows"] = int(pm.shape[0])
            pcol += int(pm.shape[1])
        plan["blocks"].append(entry)
    plan["film_base"] = col
    plan["film_total"] = fcol

    w_slab = jnp.concatenate(w_parts, axis=0)                          # (rows, max_w)
    bias_slab = jnp.concatenate(bias_parts + film_b_parts, axis=1)     # (1, conv+film)
    wf_slab = jnp.concatenate(film_w_parts, axis=1)                    # (D, film_total)

    # Lane-dense internal layout: rows = batch*time, lanes = freq*channels.
    x2d = jnp.transpose(x_nchw, (0, 2, 3, 1)).reshape(num_steps, BBT, F0 * Cin0)
    cond3 = cond.reshape(num_steps, BB, D)

    inputs = [x2d, cond3, w_slab, bias_slab, wf_slab]
    in_specs = [
        pl.BlockSpec((1, BBT, F0 * Cin0), lambda s: (s, 0, 0)),
        pl.BlockSpec((1, BB, D), lambda s: (s, 0, 0)),
        pl.BlockSpec(w_slab.shape, lambda s: (0, 0)),
        pl.BlockSpec(bias_slab.shape, lambda s: (0, 0)),
        pl.BlockSpec(wf_slab.shape, lambda s: (0, 0)),
    ]
    if blocks_num > 0:
        pool_slab = jnp.concatenate(pool_parts, axis=1)
        inputs.append(pool_slab)
        in_specs.append(pl.BlockSpec(pool_slab.shape, lambda s: (0, 0)))

    out_shapes, out_specs = [], []
    for e in plan["blocks"]:
        out_shapes.append(jax.ShapeDtypeStruct((num_steps, BB, T * e["FC"]), jnp.float32))
        out_specs.append(pl.BlockSpec((1, BB, T * e["FC"]), lambda s: (s, 0, 0)))

    kernel = _make_encoder_kernel(plan, BB, T, blocks_num)
    outs = pl.pallas_call(
        kernel,
        out_shape=tuple(out_shapes),
        grid=(num_steps,),
        in_specs=in_specs,
        out_specs=tuple(out_specs),
        compiler_params=pltpu.CompilerParams(
            dimension_semantics=("parallel",)),
    )(*inputs)

    def to_nchw(y, F, C):
        return jnp.transpose(y.reshape(B, T, F, C), (0, 3, 1, 2))

    metaFC = [(blk["F"], blk["C"]) for blk in fused]
    concat = [to_nchw(outs[i], metaFC[i][0], metaFC[i][1]) for i in range(blocks_num)]
    final = to_nchw(outs[blocks_num], metaFC[blocks_num][0], metaFC[blocks_num][1])
    return final, concat


# --------------------------------------------------------------------------
# Pure-JAX reference (mirrors the PyTorch module, NCHW) for correctness check
# --------------------------------------------------------------------------

def encoder_forward_ref(x_nchw, cond, params, blocks_num):
    B = x_nchw.shape[0]
    x = x_nchw * BN0_SCALE
    concat = []
    for i in range(blocks_num + 1):
        p = params["blocks"][i]
        for w, s, h in ((p["w1"], p["s1"], p["h1"]), (p["w2"], p["s2"], p["h2"])):
            x = jax.lax.conv_general_dilated(
                x, w, window_strides=(1, 1), padding="SAME",
                dimension_numbers=("NCHW", "HWIO", "NCHW"),
                precision=jax.lax.Precision.HIGHEST)
            x = jnp.maximum(x * s[None, :, None, None] + h[None, :, None, None], 0.0)
        C, F = p["out_ch"], p["fsize"]
        g = (cond @ p["wg"] + p["bg"]).reshape(B, C, F)[:, :, None, :]   # [B,C,1,F]
        be = (cond @ p["wb"] + p["bb"]).reshape(B, C, F)[:, :, None, :]
        x = x * g + be
        if i < blocks_num:
            concat.append(x)
            x = 0.5 * (x[..., 0::2] + x[..., 1::2])   # avg_pool2d(kernel=(1,2))
    return x, concat


# --------------------------------------------------------------------------
# Parameters
# --------------------------------------------------------------------------

def init_params(key, blocks_num, input_channels_num, input_size, condition_dim):
    bn_scale = float((1.0 + BN_EPS) ** -0.5)   # gamma=1, beta=0, mean=0, var=1
    params = {"blocks": []}
    in_ch, out_ch, fsize = input_channels_num, 2, input_size
    for _ in range(blocks_num + 1):
        key, k1, k2, k3, k4, k5, k6 = jax.random.split(key, 7)
        params["blocks"].append({
            "w1": 0.1 * jax.random.normal(k1, (3, 3, in_ch, out_ch), jnp.float32),
            "w2": 0.1 * jax.random.normal(k2, (3, 3, out_ch, out_ch), jnp.float32),
            "s1": jnp.full((out_ch,), bn_scale, jnp.float32),
            "h1": jnp.zeros((out_ch,), jnp.float32),
            "s2": jnp.full((out_ch,), bn_scale, jnp.float32),
            "h2": jnp.zeros((out_ch,), jnp.float32),
            # FiLM gamma / beta linear layers: cond_dim -> out_ch * fsize
            "wg": 0.1 * jax.random.normal(k3, (condition_dim, out_ch * fsize), jnp.float32),
            "bg": 1.0 + 0.05 * jax.random.normal(k4, (out_ch * fsize,), jnp.float32),
            "wb": 0.1 * jax.random.normal(k5, (condition_dim, out_ch * fsize), jnp.float32),
            "bb": 0.05 * jax.random.normal(k6, (out_ch * fsize,), jnp.float32),
            "in_ch": in_ch, "out_ch": out_ch, "fsize": fsize,
        })
        in_ch, out_ch, fsize = out_ch, out_ch * 2, fsize // 2
    return params


# --------------------------------------------------------------------------
# Main
# --------------------------------------------------------------------------

if __name__ == "__main__":
    key = jax.random.PRNGKey(0)
    kx, kc, kp = jax.random.split(key, 3)

    B, T, FREQ = 2, 8, 16
    blocks_num, input_channels_num, condition_dim = 2, 1, 8

    x = jax.random.normal(kx, (B, input_channels_num, T, FREQ), jnp.float32)
    cond = jax.random.normal(kc, (B, condition_dim), jnp.float32)
    params = init_params(kp, blocks_num, input_channels_num, FREQ, condition_dim)

    out, concat = encoder_forward_pallas(x, cond, params, blocks_num)
    out = jax.block_until_ready(out)
    concat = [jax.block_until_ready(c) for c in concat]

    # Shapes match the PyTorch Encoder semantics.
    assert out.shape == (B, 8, T, 4), out.shape
    assert [tuple(c.shape) for c in concat] == [(B, 2, T, 16), (B, 4, T, 8)]

    # Numerical check against the pure-JAX NCHW reference.
    ref_out, ref_concat = encoder_forward_ref(x, cond, params, blocks_num)
    err = float(jnp.max(jnp.abs(out - ref_out)))
    assert err < 1e-3, err
    for c, rc in zip(concat, ref_concat):
        e = float(jnp.max(jnp.abs(c - rc)))
        assert e < 1e-3, e

    print("KERNEL_OK")
</pallas_src>

<mosaic_0001>
module attributes {stable_mosaic.version = 11 : i64} {
  func.func @kernel(%arg0: i32, %arg1: memref<1x16x16xf32, #tpu.memory_space<vmem>>, %arg2: memref<1x2x8xf32, #tpu.memory_space<vmem>>, %arg3: memref<432x32xf32, #tpu.memory_space<vmem>>, %arg4: memref<1x384xf32, #tpu.memory_space<vmem>>, %arg5: memref<8x192xf32, #tpu.memory_space<vmem>>, %arg6: memref<32x32xf32, #tpu.memory_space<vmem>>, %arg7: memref<1x2x256xf32, #tpu.memory_space<vmem>>, %arg8: memref<1x2x256xf32, #tpu.memory_space<vmem>>, %arg9: memref<1x2x256xf32, #tpu.memory_space<vmem>>) attributes {dimension_semantics = [#tpu.dimension_semantics<parallel>], iteration_bounds = array<i64: 1>, scalar_prefetch = 0 : i64, scratch_operands = 0 : i64, tpu.core_type = #tpu.core_type<tc>, window_params = [{transform_indices = @transform_0, window_bounds = array<i64: 1, 16, 16>}, {transform_indices = @transform_1, window_bounds = array<i64: 1, 2, 8>}, {pipeline_mode = #tpu.pipeline_mode<synchronous>, transform_indices = @transform_2, window_bounds = array<i64: 432, 32>}, {pipeline_mode = #tpu.pipeline_mode<synchronous>, transform_indices = @transform_3, window_bounds = array<i64: 1, 384>}, {pipeline_mode = #tpu.pipeline_mode<synchronous>, transform_indices = @transform_4, window_bounds = array<i64: 8, 192>}, {pipeline_mode = #tpu.pipeline_mode<synchronous>, transform_indices = @transform_5, window_bounds = array<i64: 32, 32>}, {transform_indices = @transform_6, window_bounds = array<i64: 1, 2, 256>}, {transform_indices = @transform_7, window_bounds = array<i64: 1, 2, 256>}, {transform_indices = @transform_8, window_bounds = array<i64: 1, 2, 256>}]} {
    %c0 = arith.constant 0 : index
    %c0_0 = arith.constant 0 : index
    %c0_1 = arith.constant 0 : index
    %0 = vector.load %arg1[%c0, %c0_0, %c0_1] : memref<1x16x16xf32, #tpu.memory_space<vmem>>, vector<1x16x16xf32>
    %1 = vector.shape_cast %0 : vector<1x16x16xf32> to vector<16x16xf32>
    %c0_2 = arith.constant 0 : index
    %c0_3 = arith.constant 0 : index
    %c0_4 = arith.constant 0 : index
    %2 = vector.load %arg2[%c0_2, %c0_3, %c0_4] : memref<1x2x8xf32, #tpu.memory_space<vmem>>, vector<1x2x8xf32>
    %3 = vector.shape_cast %2 : vector<1x2x8xf32> to vector<2x8xf32>
    %4 = tpu.iota {dimensions = array<i32: 0>} : vector<16x1xi32>
    %c8_i32 = arith.constant 8 : i32
    %c0_i32 = arith.constant 0 : i32
    %5 = arith.cmpi eq, %c8_i32, %c0_i32 : i32
    %c1_i32 = arith.constant 1 : i32
    %6 = arith.select %5, %c1_i32, %c8_i32 : i32
    %7 = vector.broadcast %6 : i32 to vector<16x1xi32>
    %8 = arith.remsi %4, %7 : vector<16x1xi32>
    %c0_i32_5 = arith.constant 0 : i32
    %9 = vector.broadcast %c0_i32_5 : i32 to vector<16x1xi32>
    %10 = arith.cmpi ne, %8, %9 : vector<16x1xi32>
    %c0_i32_6 = arith.constant 0 : i32
    %11 = vector.broadcast %c0_i32_6 : i32 to vector<16x1xi32>
    %12 = arith.cmpi slt, %8, %11 : vector<16x1xi32>
    %c0_i32_7 = arith.constant 0 : i32
    %13 = arith.cmpi slt, %6, %c0_i32_7 : i32
    %14 = vector.broadcast %13 : i1 to vector<16x1xi1>
    %15 = vector.broadcast %14 : vector<16x1xi1> to vector<16x1xi1>
    %16 = arith.xori %12, %15 : vector<16x1xi1>
    %17 = arith.andi %16, %10 : vector<16x1xi1>
    %18 = vector.broadcast %6 : i32 to vector<16x1xi32>
    %19 = arith.addi %8, %18 : vector<16x1xi32>
    %20 = arith.select %17, %19, %8 : vector<16x1xi1>, vector<16x1xi32>
    %c0_i32_8 = arith.constant 0 : i32
    %21 = vector.broadcast %c0_i32_8 : i32 to vector<16x1xi32>
    %22 = arith.cmpi ne, %20, %21 : vector<16x1xi32>
    %c8_i32_9 = arith.constant 8 : i32
    %c0_i32_10 = arith.constant 0 : i32
    %23 = arith.cmpi eq, %c8_i32_9, %c0_i32_10 : i32
    %c1_i32_11 = arith.constant 1 : i32
    %24 = arith.select %23, %c1_i32_11, %c8_i32_9 : i32
    %25 = vector.broadcast %24 : i32 to vector<16x1xi32>
    %26 = arith.remsi %4, %25 : vector<16x1xi32>
    %c0_i32_12 = arith.constant 0 : i32
    %27 = vector.broadcast %c0_i32_12 : i32 to vector<16x1xi32>
    %28 = arith.cmpi ne, %26, %27 : vector<16x1xi32>
    %c0_i32_13 = arith.constant 0 : i32
    %29 = vector.broadcast %c0_i32_13 : i32 to vector<16x1xi32>
    %30 = arith.cmpi slt, %26, %29 : vector<16x1xi32>
    %c0_i32_14 = arith.constant 0 : i32
    %31 = arith.cmpi slt, %24, %c0_i32_14 : i32
    %32 = vector.broadcast %31 : i1 to vector<16x1xi1>
    %33 = vector.broadcast %32 : vector<16x1xi1> to vector<16x1xi1>
    %34 = arith.xori %30, %33 : vector<16x1xi1>
    %35 = arith.andi %34, %28 : vector<16x1xi1>
    %36 = vector.broadcast %24 : i32 to vector<16x1xi32>
    %37 = arith.addi %26, %36 : vector<16x1xi32>
    %38 = arith.select %35, %37, %26 : vector<16x1xi1>, vector<16x1xi32>
    %c7_i32 = arith.constant 7 : i32
    %39 = vector.broadcast %c7_i32 : i32 to vector<16x1xi32>
    %40 = arith.cmpi ne, %38, %39 : vector<16x1xi32>
    %c0_15 = arith.constant 0 : index
    %c0_16 = arith.constant 0 : index
    %41 = vector.load %arg5[%c0_15, %c0_16] : memref<8x192xf32, #tpu.memory_space<vmem>>, vector<8x192xf32>
    %cst = arith.constant dense<0.000000e+00> : vector<2x192xf32>
    %42 = tpu.matmul %3, %41, %cst {dimension_numbers = #tpu.dot_dimension_numbers<[1], [0], [0], [1], [0, 0, 1, 1], [], []>} : vector<2x8xf32>, vector<8x192xf32>, vector<2x192xf32> -> vector<2x192xf32>
    %c0_17 = arith.constant 0 : index
    %c192 = arith.constant 192 : index
    %43 = vector.load %arg4[%c0_17, %c192] : memref<1x384xf32, #tpu.memory_space<vmem>>, vector<1x192xf32>
    %44 = vector.broadcast %43 : vector<1x192xf32> to vector<2x192xf32>
    %45 = arith.addf %42, %44 : vector<2x192xf32>
    %c0_18 = arith.constant 0 : index
    %c0_19 = arith.constant 0 : index
    %46 = vector.load %arg3[%c0_18, %c0_19] : memref<432x32xf32, #tpu.memory_space<vmem>>, vector<16x32xf32>
    %c16 = arith.constant 16 : index
    %c0_20 = arith.constant 0 : index
    %47 = vector.load %arg3[%c16, %c0_20] : memref<432x32xf32, #tpu.memory_space<vmem>>, vector<16x32xf32>
    %c32 = arith.constant 32 : index
    %c0_21 = arith.constant 0 : index
    %48 = vector.load %arg3[%c32, %c0_21] : memref<432x32xf32, #tpu.memory_space<vmem>>, vector<16x32xf32>
    %cst_22 = arith.constant 0.000000e+00 : f32
    %49 = vector.broadcast %cst_22 : f32 to vector<1x16xf32>
    %50 = vector.extract_strided_slice %1 {offsets = [0, 0], sizes = [15, 16], strides = [1, 1]} : vector<16x16xf32> to vector<15x16xf32>
    %51 = tpu.concatenate %49, %50 in 0 : vector<1x16xf32>, vector<15x16xf32> -> vector<16x16xf32>
    %cst_23 = arith.constant 0.000000e+00 : f32
    %52 = vector.shape_cast %22 : vector<16x1xi1> to vector<16x1xi1>
    %53 = vector.broadcast %52 : vector<16x1xi1> to vector<16x16xi1>
    %54 = vector.broadcast %cst_23 : f32 to vector<16x16xf32>
    %55 = arith.select %53, %51, %54 : vector<16x16xi1>, vector<16x16xf32>
    %cst_24 = arith.constant dense<0.000000e+00> : vector<16x32xf32>
    %56 = tpu.matmul %55, %46, %cst_24 {dimension_numbers = #tpu.dot_dimension_numbers<[1], [0], [0], [1], [0, 0, 1, 1], [], []>} : vector<16x16xf32>, vector<16x32xf32>, vector<16x32xf32> -> vector<16x32xf32>
    %cst_25 = arith.constant dense<0.000000e+00> : vector<16x32xf32>
    %57 = tpu.matmul %1, %47, %cst_25 {dimension_numbers = #tpu.dot_dimension_numbers<[1], [0], [0], [1], [0, 0, 1, 1], [], []>} : vector<16x16xf32>, vector<16x32xf32>, vector<16x32xf32> -> vector<16x32xf32>
    %58 = arith.addf %56, %57 : vector<16x32xf32>
    %cst_26 = arith.constant 0.000000e+00 : f32
    %59 = vector.broadcast %cst_26 : f32 to vector<1x16xf32>
    %60 = vector.extract_strided_slice %1 {offsets = [1, 0], sizes = [15, 16], strides = [1, 1]} : vector<16x16xf32> to vector<15x16xf32>
    %61 = tpu.concatenate %60, %59 in 0 : vector<15x16xf32>, vector<1x16xf32> -> vector<16x16xf32>
    %cst_27 = arith.constant 0.000000e+00 : f32
    %62 = vector.shape_cast %40 : vector<16x1xi1> to vector<16x1xi1>
    %63 = vector.broadcast %62 : vector<16x1xi1> to vector<16x16xi1>
    %64 = vector.broadcast %cst_27 : f32 to vector<16x16xf32>
    %65 = arith.select %63, %61, %64 : vector<16x16xi1>, vector<16x16xf32>
    %cst_28 = arith.constant dense<0.000000e+00> : vector<16x32xf32>
    %66 = tpu.matmul %65, %48, %cst_28 {dimension_numbers = #tpu.dot_dimension_numbers<[1], [0], [0], [1], [0, 0, 1, 1], [], []>} : vector<16x16xf32>, vector<16x32xf32>, vector<16x32xf32> -> vector<16x32xf32>
    %67 = arith.addf %58, %66 : vector<16x32xf32>
    %c0_29 = arith.constant 0 : index
    %c0_30 = arith.constant 0 : index
    %68 = vector.load %arg4[%c0_29, %c0_30] : memref<1x384xf32, #tpu.memory_space<vmem>>, vector<1x32xf32>
    %69 = vector.broadcast %68 : vector<1x32xf32> to vector<16x32xf32>
    %70 = arith.addf %67, %69 : vector<16x32xf32>
    %cst_31 = arith.constant 0.000000e+00 : f32
    %71 = vector.broadcast %cst_31 : f32 to vector<16x32xf32>
    %72 = arith.maximumf %70, %71 : vector<16x32xf32>
    %c48 = arith.constant 48 : index
    %c0_32 = arith.constant 0 : index
    %73 = vector.load %arg3[%c48, %c0_32] : memref<432x32xf32, #tpu.memory_space<vmem>>, vector<32x32xf32>
    %c80 = arith.constant 80 : index
    %c0_33 = arith.constant 0 : index
    %74 = vector.load %arg3[%c80, %c0_33] : memref<432x32xf32, #tpu.memory_space<vmem>>, vector<32x32xf32>
    %c112 = arith.constant 112 : index
    %c0_34 = arith.constant 0 : index
    %75 = vector.load %arg3[%c112, %c0_34] : memref<432x32xf32, #tpu.memory_space<vmem>>, vector<32x32xf32>
    %cst_35 = arith.constant 0.000000e+00 : f32
    %76 = vector.broadcast %cst_35 : f32 to vector<1x32xf32>
    %77 = vector.extract_strided_slice %72 {offsets = [0, 0], sizes = [15, 32], strides = [1, 1]} : vector<16x32xf32> to vector<15x32xf32>
    %78 = tpu.concatenate %76, %77 in 0 : vector<1x32xf32>, vector<15x32xf32> -> vector<16x32xf32>
    %cst_36 = arith.constant 0.000000e+00 : f32
    %79 = vector.shape_cast %22 : vector<16x1xi1> to vector<16x1xi1>
    %80 = vector.broadcast %79 : vector<16x1xi1> to vector<16x32xi1>
    %81 = vector.broadcast %cst_36 : f32 to vector<16x32xf32>
    %82 = arith.select %80, %78, %81 : vector<16x32xi1>, vector<16x32xf32>
    %cst_37 = arith.constant dense<0.000000e+00> : vector<16x32xf32>
    %83 = tpu.matmul %82, %73, %cst_37 {dimension_numbers = #tpu.dot_dimension_numbers<[1], [0], [0], [1], [0, 0, 1, 1], [], []>} : vector<16x32xf32>, vector<32x32xf32>, vector<16x32xf32> -> vector<16x32xf32>
    %cst_38 = arith.constant dense<0.000000e+00> : vector<16x32xf32>
    %84 = tpu.matmul %72, %74, %cst_38 {dimension_numbers = #tpu.dot_dimension_numbers<[1], [0], [0], [1], [0, 0, 1, 1], [], []>} : vector<16x32xf32>, vector<32x32xf32>, vector<16x32xf32> -> vector<16x32xf32>
    %85 = arith.addf %83, %84 : vector<16x32xf32>
    %cst_39 = arith.constant 0.000000e+00 : f32
    %86 = vector.broadcast %cst_39 : f32 to vector<1x32xf32>
    %87 = vector.extract_strided_slice %72 {offsets = [1, 0], sizes = [15, 32], strides = [1, 1]} : vector<16x32xf32> to vector<15x32xf32>
    %88 = tpu.concatenate %87, %86 in 0 : vector<15x32xf32>, vector<1x32xf32> -> vector<16x32xf32>
    %cst_40 = arith.constant 0.000000e+00 : f32
    %89 = vector.shape_cast %40 : vector<16x1xi1> to vector<16x1xi1>
    %90 = vector.broadcast %89 : vector<16x1xi1> to vector<16x32xi1>
    %91 = vector.broadcast %cst_40 : f32 to vector<16x32xf32>
    %92 = arith.select %90, %88, %91 : vector<16x32xi1>, vector<16x32xf32>
    %cst_41 = arith.constant dense<0.000000e+00> : vector<16x32xf32>
    %93 = tpu.matmul %92, %75, %cst_41 {dimension_numbers = #tpu.dot_dimension_numbers<[1], [0], [0], [1], [0, 0, 1, 1], [], []>} : vector<16x32xf32>, vector<32x32xf32>, vector<16x32xf32> -> vector<16x32xf32>
    %94 = arith.addf %85, %93 : vector<16x32xf32>
    %c0_42 = arith.constant 0 : index
    %c32_43 = arith.constant 32 : index
    %95 = vector.load %arg4[%c0_42, %c32_43] : memref<1x384xf32, #tpu.memory_space<vmem>>, vector<1x32xf32>
    %96 = vector.broadcast %95 : vector<1x32xf32> to vector<16x32xf32>
    %97 = arith.addf %94, %96 : vector<16x32xf32>
    %cst_44 = arith.constant 0.000000e+00 : f32
    %98 = vector.broadcast %cst_44 : f32 to vector<16x32xf32>
    %99 = arith.maximumf %97, %98 : vector<16x32xf32>
    %100 = vector.extract_strided_slice %45 {offsets = [0, 0], sizes = [2, 64], strides = [1, 1]} : vector<2x192xf32> to vector<2x64xf32>
    %101 = vector.extract_strided_slice %100 {offsets = [0, 0], sizes = [1, 64], strides = [1, 1]} : vector<2x64xf32> to vector<1x64xf32>
    %102 = vector.shape_cast %101 : vector<1x64xf32> to vector<1x64xf32>
    %103 = vector.broadcast %102 : vector<1x64xf32> to vector<8x64xf32>
    %104 = vector.extract_strided_slice %100 {offsets = [1, 0], sizes = [1, 64], strides = [1, 1]} : vector<2x64xf32> to vector<1x64xf32>
    %105 = vector.shape_cast %104 : vector<1x64xf32> to vector<1x64xf32>
    %106 = vector.broadcast %105 : vector<1x64xf32> to vector<8x64xf32>
    %107 = tpu.concatenate %103, %106 in 0 : vector<8x64xf32>, vector<8x64xf32> -> vector<16x64xf32>
    %108 = vector.extract_strided_slice %107 {offsets = [0, 0], sizes = [16, 32], strides = [1, 1]} : vector<16x64xf32> to vector<16x32xf32>
    %109 = arith.mulf %99, %108 : vector<16x32xf32>
    %110 = vector.extract_strided_slice %107 {offsets = [0, 32], sizes = [16, 32], strides = [1, 1]} : vector<16x64xf32> to vector<16x32xf32>
    %111 = arith.addf %109, %110 : vector<16x32xf32>
    %112 = vector.extract_strided_slice %111 {offsets = [0, 0], sizes = [1, 32], strides = [1, 1]} : vector<16x32xf32> to vector<1x32xf32>
    %113 = vector.extract_strided_slice %111 {offsets = [1, 0], sizes = [1, 32], strides = [1, 1]} : vector<16x32xf32> to vector<1x32xf32>
    %114 = vector.extract_strided_slice %111 {offsets = [2, 0], sizes = [1, 32], strides = [1, 1]} : vector<16x32xf32> to vector<1x32xf32>
    %115 = vector.extract_strided_slice %111 {offsets = [3, 0], sizes = [1, 32], strides = [1, 1]} : vector<16x32xf32> to vector<1x32xf32>
    %116 = vector.extract_strided_slice %111 {offsets = [4, 0], sizes = [1, 32], strides = [1, 1]} : vector<16x32xf32> to vector<1x32xf32>
    %117 = vector.extract_strided_slice %111 {offsets = [5, 0], sizes = [1, 32], strides = [1, 1]} : vector<16x32xf32> to vector<1x32xf32>
    %118 = vector.extract_strided_slice %111 {offsets = [6, 0], sizes = [1, 32], strides = [1, 1]} : vector<16x32xf32> to vector<1x32xf32>
    %119 = vector.extract_strided_slice %111 {offsets = [7, 0], sizes = [1, 32], strides = [1, 1]} : vector<16x32xf32> to vector<1x32xf32>
    %120 = tpu.concatenate %112, %113, %114, %115, %116, %117, %118, %119 in 1 : vector<1x32xf32>, vector<1x32xf32>, vector<1x32xf32>, vector<1x32xf32>, vector<1x32xf32>, vector<1x32xf32>, vector<1x32xf32>, vector<1x32xf32> -> vector<1x256xf32>
    %121 = vector.extract_strided_slice %111 {offsets = [8, 0], sizes = [1, 32], strides = [1, 1]} : vector<16x32xf32> to vector<1x32xf32>
    %122 = vector.extract_strided_slice %111 {offsets = [9, 0], sizes = [1, 32], strides = [1, 1]} : vector<16x32xf32> to vector<1x32xf32>
    %123 = vector.extract_strided_slice %111 {offsets = [10, 0], sizes = [1, 32], strides = [1, 1]} : vector<16x32xf32> to vector<1x32xf32>
    %124 = vector.extract_strided_slice %111 {offsets = [11, 0], sizes = [1, 32], strides = [1, 1]} : vector<16x32xf32> to vector<1x32xf32>
    %125 = vector.extract_strided_slice %111 {offsets = [12, 0], sizes = [1, 32], strides = [1, 1]} : vector<16x32xf32> to vector<1x32xf32>
    %126 = vector.extract_strided_slice %111 {offsets = [13, 0], sizes = [1, 32], strides = [1, 1]} : vector<16x32xf32> to vector<1x32xf32>
    %127 = vector.extract_strided_slice %111 {offsets = [14, 0], sizes = [1, 32], strides = [1, 1]} : vector<16x32xf32> to vector<1x32xf32>
    %128 = vector.extract_strided_slice %111 {offsets = [15, 0], sizes = [1, 32], strides = [1, 1]} : vector<16x32xf32> to vector<1x32xf32>
    %129 = tpu.concatenate %121, %122, %123, %124, %125, %126, %127, %128 in 1 : vector<1x32xf32>, vector<1x32xf32>, vector<1x32xf32>, vector<1x32xf32>, vector<1x32xf32>, vector<1x32xf32>, vector<1x32xf32>, vector<1x32xf32> -> vector<1x256xf32>
    %130 = tpu.concatenate %120, %129 in 0 : vector<1x256xf32>, vector<1x256xf32> -> vector<2x256xf32>
    %131 = vector.shape_cast %130 : vector<2x256xf32> to vector<1x2x256xf32>
    %c0_45 = arith.constant 0 : index
    %c0_46 = arith.constant 0 : index
    %c0_47 = arith.constant 0 : index
    %132 = vector.load %arg7[%c0_45, %c0_46, %c0_47] : memref<1x2x256xf32, #tpu.memory_space<vmem>>, vector<1x2x256xf32>
    tpu.vector_store %arg7[%c0_45, %c0_46, %c0_47], %131 {strides = array<i32>} : memref<1x2x256xf32, #tpu.memory_space<vmem>>, vector<1x2x256xf32>,
    %c0_48 = arith.constant 0 : index
    %c0_49 = arith.constant 0 : index
    %133 = vector.load %arg6[%c0_48, %c0_49] : memref<32x32xf32, #tpu.memory_space<vmem>>, vector<32x16xf32>
    %cst_50 = arith.constant dense<0.000000e+00> : vector<16x16xf32>
    %134 = tpu.matmul %111, %133, %cst_50 {dimension_numbers = #tpu.dot_dimension_numbers<[1], [0], [0], [1], [0, 0, 1, 1], [], []>} : vector<16x32xf32>, vector<32x16xf32>, vector<16x16xf32> -> vector<16x16xf32>
    %c144 = arith.constant 144 : index
    %c0_51 = arith.constant 0 : index
    %135 = vector.load %arg3[%c144, %c0_51] : memref<432x32xf32, #tpu.memory_space<vmem>>, vector<16x32xf32>
    %c160 = arith.constant 160 : index
    %c0_52 = arith.constant 0 : index
    %136 = vector.load %arg3[%c160, %c0_52] : memref<432x32xf32, #tpu.memory_space<vmem>>, vector<16x32xf32>
    %c176 = arith.constant 176 : index
    %c0_53 = arith.constant 0 : index
    %137 = vector.load %arg3[%c176, %c0_53] : memref<432x32xf32, #tpu.memory_space<vmem>>, vector<16x32xf32>
    %cst_54 = arith.constant 0.000000e+00 : f32
    %138 = vector.broadcast %cst_54 : f32 to vector<1x16xf32>
    %139 = vector.extract_strided_slice %134 {offsets = [0, 0], sizes = [15, 16], strides = [1, 1]} : vector<16x16xf32> to vector<15x16xf32>
    %140 = tpu.concatenate %138, %139 in 0 : vector<1x16xf32>, vector<15x16xf32> -> vector<16x16xf32>
    %cst_55 = arith.constant 0.000000e+00 : f32
    %141 = vector.shape_cast %22 : vector<16x1xi1> to vector<16x1xi1>
    %142 = vector.broadcast %141 : vector<16x1xi1> to vector<16x16xi1>
    %143 = vector.broadcast %cst_55 : f32 to vector<16x16xf32>
    %144 = arith.select %142, %140, %143 : vector<16x16xi1>, vector<16x16xf32>
    %cst_56 = arith.constant dense<0.000000e+00> : vector<16x32xf32>
    %145 = tpu.matmul %144, %135, %cst_56 {dimension_numbers = #tpu.dot_dimension_numbers<[1], [0], [0], [1], [0, 0, 1, 1], [], []>} : vector<16x16xf32>, vector<16x32xf32>, vector<16x32xf32> -> vector<16x32xf32>
    %cst_57 = arith.constant dense<0.000000e+00> : vector<16x32xf32>
    %146 = tpu.matmul %134, %136, %cst_57 {dimension_numbers = #tpu.dot_dimension_numbers<[1], [0], [0], [1], [0, 0, 1, 1], [], []>} : vector<16x16xf32>, vector<16x32xf32>, vector<16x32xf32> -> vector<16x32xf32>
    %147 = arith.addf %145, %146 : vector<16x32xf32>
    %cst_58 = arith.constant 0.000000e+00 : f32
    %148 = vector.broadcast %cst_58 : f32 to vector<1x16xf32>
    %149 = vector.extract_strided_slice %134 {offsets = [1, 0], sizes = [15, 16], strides = [1, 1]} : vector<16x16xf32> to vector<15x16xf32>
    %150 = tpu.concatenate %149, %148 in 0 : vector<15x16xf32>, vector<1x16xf32> -> vector<16x16xf32>
    %cst_59 = arith.constant 0.000000e+00 : f32
    %151 = vector.shape_cast %40 : vector<16x1xi1> to vector<16x1xi1>
    %152 = vector.broadcast %151 : vector<16x1xi1> to vector<16x16xi1>
    %153 = vector.broadcast %cst_59 : f32 to vector<16x16xf32>
    %154 = arith.select %152, %150, %153 : vector<16x16xi1>, vector<16x16xf32>
    %cst_60 = arith.constant dense<0.000000e+00> : vector<16x32xf32>
    %155 = tpu.matmul %154, %137, %cst_60 {dimension_numbers = #tpu.dot_dimension_numbers<[1], [0], [0], [1], [0, 0, 1, 1], [], []>} : vector<16x16xf32>, vector<16x32xf32>, vector<16x32xf32> -> vector<16x32xf32>
    %156 = arith.addf %147, %155 : vector<16x32xf32>
    %c0_61 = arith.constant 0 : index
    %c64 = arith.constant 64 : index
    %157 = vector.load %arg4[%c0_61, %c64] : memref<1x384xf32, #tpu.memory_space<vmem>>, vector<1x32xf32>
    %158 = vector.broadcast %157 : vector<1x32xf32> to vector<16x32xf32>
    %159 = arith.addf %156, %158 : vector<16x32xf32>
    %cst_62 = arith.constant 0.000000e+00 : f32
    %160 = vector.broadcast %cst_62 : f32 to vector<16x32xf32>
    %161 = arith.maximumf %159, %160 : vector<16x32xf32>
    %c192_63 = arith.constant 192 : index
    %c0_64 = arith.constant 0 : index
    %162 = vector.load %arg3[%c192_63, %c0_64] : memref<432x32xf32, #tpu.memory_space<vmem>>, vector<32x32xf32>
    %c224 = arith.constant 224 : index
    %c0_65 = arith.constant 0 : index
    %163 = vector.load %arg3[%c224, %c0_65] : memref<432x32xf32, #tpu.memory_space<vmem>>, vector<32x32xf32>
    %c256 = arith.constant 256 : index
    %c0_66 = arith.constant 0 : index
    %164 = vector.load %arg3[%c256, %c0_66] : memref<432x32xf32, #tpu.memory_space<vmem>>, vector<32x32xf32>
    %cst_67 = arith.constant 0.000000e+00 : f32
    %165 = vector.broadcast %cst_67 : f32 to vector<1x32xf32>
    %166 = vector.extract_strided_slice %161 {offsets = [0, 0], sizes = [15, 32], strides = [1, 1]} : vector<16x32xf32> to vector<15x32xf32>
    %167 = tpu.concatenate %165, %166 in 0 : vector<1x32xf32>, vector<15x32xf32> -> vector<16x32xf32>
    %cst_68 = arith.constant 0.000000e+00 : f32
    %168 = vector.shape_cast %22 : vector<16x1xi1> to vector<16x1xi1>
    %169 = vector.broadcast %168 : vector<16x1xi1> to vector<16x32xi1>
    %170 = vector.broadcast %cst_68 : f32 to vector<16x32xf32>
    %171 = arith.select %169, %167, %170 : vector<16x32xi1>, vector<16x32xf32>
    %cst_69 = arith.constant dense<0.000000e+00> : vector<16x32xf32>
    %172 = tpu.matmul %171, %162, %cst_69 {dimension_numbers = #tpu.dot_dimension_numbers<[1], [0], [0], [1], [0, 0, 1, 1], [], []>} : vector<16x32xf32>, vector<32x32xf32>, vector<16x32xf32> -> vector<16x32xf32>
    %cst_70 = arith.constant dense<0.000000e+00> : vector<16x32xf32>
    %173 = tpu.matmul %161, %163, %cst_70 {dimension_numbers = #tpu.dot_dimension_numbers<[1], [0], [0], [1], [0, 0, 1, 1], [], []>} : vector<16x32xf32>, vector<32x32xf32>, vector<16x32xf32> -> vector<16x32xf32>
    %174 = arith.addf %172, %173 : vector<16x32xf32>
    %cst_71 = arith.constant 0.000000e+00 : f32
    %175 = vector.broadcast %cst_71 : f32 to vector<1x32xf32>
    %176 = vector.extract_strided_slice %161 {offsets = [1, 0], sizes = [15, 32], strides = [1, 1]} : vector<16x32xf32> to vector<15x32xf32>
    %177 = tpu.concatenate %176, %175 in 0 : vector<15x32xf32>, vector<1x32xf32> -> vector<16x32xf32>
    %cst_72 = arith.constant 0.000000e+00 : f32
    %178 = vector.shape_cast %40 : vector<16x1xi1> to vector<16x1xi1>
    %179 = vector.broadcast %178 : vector<16x1xi1> to vector<16x32xi1>
    %180 = vector.broadcast %cst_72 : f32 to vector<16x32xf32>
    %181 = arith.select %179, %177, %180 : vector<16x32xi1>, vector<16x32xf32>
    %cst_73 = arith.constant dense<0.000000e+00> : vector<16x32xf32>
    %182 = tpu.matmul %181, %164, %cst_73 {dimension_numbers = #tpu.dot_dimension_numbers<[1], [0], [0], [1], [0, 0, 1, 1], [], []>} : vector<16x32xf32>, vector<32x32xf32>, vector<16x32xf32> -> vector<16x32xf32>
    %183 = arith.addf %174, %182 : vector<16x32xf32>
    %c0_74 = arith.constant 0 : index
    %c96 = arith.constant 96 : index
    %184 = vector.load %arg4[%c0_74, %c96] : memref<1x384xf32, #tpu.memory_space<vmem>>, vector<1x32xf32>
    %185 = vector.broadcast %184 : vector<1x32xf32> to vector<16x32xf32>
    %186 = arith.addf %183, %185 : vector<16x32xf32>
    %cst_75 = arith.constant 0.000000e+00 : f32
    %187 = vector.broadcast %cst_75 : f32 to vector<16x32xf32>
    %188 = arith.maximumf %186, %187 : vector<16x32xf32>
    %189 = vector.extract_strided_slice %45 {offsets = [0, 64], sizes = [2, 64], strides = [1, 1]} : vector<2x192xf32> to vector<2x64xf32>
    %190 = vector.extract_strided_slice %189 {offsets = [0, 0], sizes = [1, 64], strides = [1, 1]} : vector<2x64xf32> to vector<1x64xf32>
    %191 = vector.shape_cast %190 : vector<1x64xf32> to vector<1x64xf32>
    %192 = vector.broadcast %191 : vector<1x64xf32> to vector<8x64xf32>
    %193 = vector.extract_strided_slice %189 {offsets = [1, 0], sizes = [1, 64], strides = [1, 1]} : vector<2x64xf32> to vector<1x64xf32>
    %194 = vector.shape_cast %193 : vector<1x64xf32> to vector<1x64xf32>
    %195 = vector.broadcast %194 : vector<1x64xf32> to vector<8x64xf32>
    %196 = tpu.concatenate %192, %195 in 0 : vector<8x64xf32>, vector<8x64xf32> -> vector<16x64xf32>
    %197 = vector.extract_strided_slice %196 {offsets = [0, 0], sizes = [16, 32], strides = [1, 1]} : vector<16x64xf32> to vector<16x32xf32>
    %198 = arith.mulf %188, %197 : vector<16x32xf32>
    %199 = vector.extract_strided_slice %196 {offsets = [0, 32], sizes = [16, 32], strides = [1, 1]} : vector<16x64xf32> to vector<16x32xf32>
    %200 = arith.addf %198, %199 : vector<16x32xf32>
    %201 = vector.extract_strided_slice %200 {offsets = [0, 0], sizes = [1, 32], strides = [1, 1]} : vector<16x32xf32> to vector<1x32xf32>
    %202 = vector.extract_strided_slice %200 {offsets = [1, 0], sizes = [1, 32], strides = [1, 1]} : vector<16x32xf32> to vector<1x32xf32>
    %203 = vector.extract_strided_slice %200 {offsets = [2, 0], sizes = [1, 32], strides = [1, 1]} : vector<16x32xf32> to vector<1x32xf32>
    %204 = vector.extract_strided_slice %200 {offsets = [3, 0], sizes = [1, 32], strides = [1, 1]} : vector<16x32xf32> to vector<1x32xf32>
    %205 = vector.extract_strided_slice %200 {offsets = [4, 0], sizes = [1, 32], strides = [1, 1]} : vector<16x32xf32> to vector<1x32xf32>
    %206 = vector.extract_strided_slice %200 {offsets = [5, 0], sizes = [1, 32], strides = [1, 1]} : vector<16x32xf32> to vector<1x32xf32>
    %207 = vector.extract_strided_slice %200 {offsets = [6, 0], sizes = [1, 32], strides = [1, 1]} : vector<16x32xf32> to vector<1x32xf32>
    %208 = vector.extract_strided_slice %200 {offsets = [7, 0], sizes = [1, 32], strides = [1, 1]} : vector<16x32xf32> to vector<1x32xf32>
    %209 = tpu.concatenate %201, %202, %203, %204, %205, %206, %207, %208 in 1 : vector<1x32xf32>, vector<1x32xf32>, vector<1x32xf32>, vector<1x32xf32>, vector<1x32xf32>, vector<1x32xf32>, vector<1x32xf32>, vector<1x32xf32> -> vector<1x256xf32>
    %210 = vector.extract_strided_slice %200 {offsets = [8, 0], sizes = [1, 32], strides = [1, 1]} : vector<16x32xf32> to vector<1x32xf32>
    %211 = vector.extract_strided_slice %200 {offsets = [9, 0], sizes = [1, 32], strides = [1, 1]} : vector<16x32xf32> to vector<1x32xf32>
    %212 = vector.extract_strided_slice %200 {offsets = [10, 0], sizes = [1, 32], strides = [1, 1]} : vector<16x32xf32> to vector<1x32xf32>
    %213 = vector.extract_strided_slice %200 {offsets = [11, 0], sizes = [1, 32], strides = [1, 1]} : vector<16x32xf32> to vector<1x32xf32>
    %214 = vector.extract_strided_slice %200 {offsets = [12, 0], sizes = [1, 32], strides = [1, 1]} : vector<16x32xf32> to vector<1x32xf32>
    %215 = vector.extract_strided_slice %200 {offsets = [13, 0], sizes = [1, 32], strides = [1, 1]} : vector<16x32xf32> to vector<1x32xf32>
    %216 = vector.extract_strided_slice %200 {offsets = [14, 0], sizes = [1, 32], strides = [1, 1]} : vector<16x32xf32> to vector<1x32xf32>
    %217 = vector.extract_strided_slice %200 {offsets = [15, 0], sizes = [1, 32], strides = [1, 1]} : vector<16x32xf32> to vector<1x32xf32>
    %218 = tpu.concatenate %210, %211, %212, %213, %214, %215, %216, %217 in 1 : vector<1x32xf32>, vector<1x32xf32>, vector<1x32xf32>, vector<1x32xf32>, vector<1x32xf32>, vector<1x32xf32>, vector<1x32xf32>, vector<1x32xf32> -> vector<1x256xf32>
    %219 = tpu.concatenate %209, %218 in 0 : vector<1x256xf32>, vector<1x256xf32> -> vector<2x256xf32>
    %220 = vector.shape_cast %219 : vector<2x256xf32> to vector<1x2x256xf32>
    %c0_76 = arith.constant 0 : index
    %c0_77 = arith.constant 0 : index
    %c0_78 = arith.constant 0 : index
    %221 = vector.load %arg8[%c0_76, %c0_77, %c0_78] : memref<1x2x256xf32, #tpu.memory_space<vmem>>, vector<1x2x256xf32>
    tpu.vector_store %arg8[%c0_76, %c0_77, %c0_78], %220 {strides = array<i32>} : memref<1x2x256xf32, #tpu.memory_space<vmem>>, vector<1x2x256xf32>,
    %c0_79 = arith.constant 0 : index
    %c16_80 = arith.constant 16 : index
    %222 = vector.load %arg6[%c0_79, %c16_80] : memref<32x32xf32, #tpu.memory_space<vmem>>, vector<32x16xf32>
    %cst_81 = arith.constant dense<0.000000e+00> : vector<16x16xf32>
    %223 = tpu.matmul %200, %222, %cst_81 {dimension_numbers = #tpu.dot_dimension_numbers<[1], [0], [0], [1], [0, 0, 1, 1], [], []>} : vector<16x32xf32>, vector<32x16xf32>, vector<16x16xf32> -> vector<16x16xf32>
    %c288 = arith.constant 288 : index
    %c0_82 = arith.constant 0 : index
    %224 = vector.load %arg3[%c288, %c0_82] : memref<432x32xf32, #tpu.memory_space<vmem>>, vector<16x32xf32>
    %c304 = arith.constant 304 : index
    %c0_83 = arith.constant 0 : index
    %225 = vector.load %arg3[%c304, %c0_83] : memref<432x32xf32, #tpu.memory_space<vmem>>, vector<16x32xf32>
    %c320 = arith.constant 320 : index
    %c0_84 = arith.constant 0 : index
    %226 = vector.load %arg3[%c320, %c0_84] : memref<432x32xf32, #tpu.memory_space<vmem>>, vector<16x32xf32>
    %cst_85 = arith.constant 0.000000e+00 : f32
    %227 = vector.broadcast %cst_85 : f32 to vector<1x16xf32>
    %228 = vector.extract_strided_slice %223 {offsets = [0, 0], sizes = [15, 16], strides = [1, 1]} : vector<16x16xf32> to vector<15x16xf32>
    %229 = tpu.concatenate %227, %228 in 0 : vector<1x16xf32>, vector<15x16xf32> -> vector<16x16xf32>
    %cst_86 = arith.constant 0.000000e+00 : f32
    %230 = vector.shape_cast %22 : vector<16x1xi1> to vector<16x1xi1>
    %231 = vector.broadcast %230 : vector<16x1xi1> to vector<16x16xi1>
    %232 = vector.broadcast %cst_86 : f32 to vector<16x16xf32>
    %233 = arith.select %231, %229, %232 : vector<16x16xi1>, vector<16x16xf32>
    %cst_87 = arith.constant dense<0.000000e+00> : vector<16x32xf32>
    %234 = tpu.matmul %233, %224, %cst_87 {dimension_numbers = #tpu.dot_dimension_numbers<[1], [0], [0], [1], [0, 0, 1, 1], [], []>} : vector<16x16xf32>, vector<16x32xf32>, vector<16x32xf32> -> vector<16x32xf32>
    %cst_88 = arith.constant dense<0.000000e+00> : vector<16x32xf32>
    %235 = tpu.matmul %223, %225, %cst_88 {dimension_numbers = #tpu.dot_dimension_numbers<[1], [0], [0], [1], [0, 0, 1, 1], [], []>} : vector<16x16xf32>, vector<16x32xf32>, vector<16x32xf32> -> vector<16x32xf32>
    %236 = arith.addf %234, %235 : vector<16x32xf32>
    %cst_89 = arith.constant 0.000000e+00 : f32
    %237 = vector.broadcast %cst_89 : f32 to vector<1x16xf32>
    %238 = vector.extract_strided_slice %223 {offsets = [1, 0], sizes = [15, 16], strides = [1, 1]} : vector<16x16xf32> to vector<15x16xf32>
    %239 = tpu.concatenate %238, %237 in 0 : vector<15x16xf32>, vector<1x16xf32> -> vector<16x16xf32>
    %cst_90 = arith.constant 0.000000e+00 : f32
    %240 = vector.shape_cast %40 : vector<16x1xi1> to vector<16x1xi1>
    %241 = vector.broadcast %240 : vector<16x1xi1> to vector<16x16xi1>
    %242 = vector.broadcast %cst_90 : f32 to vector<16x16xf32>
    %243 = arith.select %241, %239, %242 : vector<16x16xi1>, vector<16x16xf32>
    %cst_91 = arith.constant dense<0.000000e+00> : vector<16x32xf32>
    %244 = tpu.matmul %243, %226, %cst_91 {dimension_numbers = #tpu.dot_dimension_numbers<[1], [0], [0], [1], [0, 0, 1, 1], [], []>} : vector<16x16xf32>, vector<16x32xf32>, vector<16x32xf32> -> vector<16x32xf32>
    %245 = arith.addf %236, %244 : vector<16x32xf32>
    %c0_92 = arith.constant 0 : index
    %c128 = arith.constant 128 : index
    %246 = vector.load %arg4[%c0_92, %c128] : memref<1x384xf32, #tpu.memory_space<vmem>>, vector<1x32xf32>
    %247 = vector.broadcast %246 : vector<1x32xf32> to vector<16x32xf32>
    %248 = arith.addf %245, %247 : vector<16x32xf32>
    %cst_93 = arith.constant 0.000000e+00 : f32
    %249 = vector.broadcast %cst_93 : f32 to vector<16x32xf32>
    %250 = arith.maximumf %248, %249 : vector<16x32xf32>
    %c336 = arith.constant 336 : index
    %c0_94 = arith.constant 0 : index
    %251 = vector.load %arg3[%c336, %c0_94] : memref<432x32xf32, #tpu.memory_space<vmem>>, vector<32x32xf32>
    %c368 = arith.constant 368 : index
    %c0_95 = arith.constant 0 : index
    %252 = vector.load %arg3[%c368, %c0_95] : memref<432x32xf32, #tpu.memory_space<vmem>>, vector<32x32xf32>
    %c400 = arith.constant 400 : index
    %c0_96 = arith.constant 0 : index
    %253 = vector.load %arg3[%c400, %c0_96] : memref<432x32xf32, #tpu.memory_space<vmem>>, vector<32x32xf32>
    %cst_97 = arith.constant 0.000000e+00 : f32
    %254 = vector.broadcast %cst_97 : f32 to vector<1x32xf32>
    %255 = vector.extract_strided_slice %250 {offsets = [0, 0], sizes = [15, 32], strides = [1, 1]} : vector<16x32xf32> to vector<15x32xf32>
    %256 = tpu.concatenate %254, %255 in 0 : vector<1x32xf32>, vector<15x32xf32> -> vector<16x32xf32>
    %cst_98 = arith.constant 0.000000e+00 : f32
    %257 = vector.shape_cast %22 : vector<16x1xi1> to vector<16x1xi1>
    %258 = vector.broadcast %257 : vector<16x1xi1> to vector<16x32xi1>
    %259 = vector.broadcast %cst_98 : f32 to vector<16x32xf32>
    %260 = arith.select %258, %256, %259 : vector<16x32xi1>, vector<16x32xf32>
    %cst_99 = arith.constant dense<0.000000e+00> : vector<16x32xf32>
    %261 = tpu.matmul %260, %251, %cst_99 {dimension_numbers = #tpu.dot_dimension_numbers<[1], [0], [0], [1], [0, 0, 1, 1], [], []>} : vector<16x32xf32>, vector<32x32xf32>, vector<16x32xf32> -> vector<16x32xf32>
    %cst_100 = arith.constant dense<0.000000e+00> : vector<16x32xf32>
    %262 = tpu.matmul %250, %252, %cst_100 {dimension_numbers = #tpu.dot_dimension_numbers<[1], [0], [0], [1], [0, 0, 1, 1], [], []>} : vector<16x32xf32>, vector<32x32xf32>, vector<16x32xf32> -> vector<16x32xf32>
    %263 = arith.addf %261, %262 : vector<16x32xf32>
    %cst_101 = arith.constant 0.000000e+00 : f32
    %264 = vector.broadcast %cst_101 : f32 to vector<1x32xf32>
    %265 = vector.extract_strided_slice %250 {offsets = [1, 0], sizes = [15, 32], strides = [1, 1]} : vector<16x32xf32> to vector<15x32xf32>
    %266 = tpu.concatenate %265, %264 in 0 : vector<15x32xf32>, vector<1x32xf32> -> vector<16x32xf32>
    %cst_102 = arith.constant 0.000000e+00 : f32
    %267 = vector.shape_cast %40 : vector<16x1xi1> to vector<16x1xi1>
    %268 = vector.broadcast %267 : vector<16x1xi1> to vector<16x32xi1>
    %269 = vector.broadcast %cst_102 : f32 to vector<16x32xf32>
    %270 = arith.select %268, %266, %269 : vector<16x32xi1>, vector<16x32xf32>
    %cst_103 = arith.constant dense<0.000000e+00> : vector<16x32xf32>
    %271 = tpu.matmul %270, %253, %cst_103 {dimension_numbers = #tpu.dot_dimension_numbers<[1], [0], [0], [1], [0, 0, 1, 1], [], []>} : vector<16x32xf32>, vector<32x32xf32>, vector<16x32xf32> -> vector<16x32xf32>
    %272 = arith.addf %263, %271 : vector<16x32xf32>
    %c0_104 = arith.constant 0 : index
    %c160_105 = arith.constant 160 : index
    %273 = vector.load %arg4[%c0_104, %c160_105] : memref<1x384xf32, #tpu.memory_space<vmem>>, vector<1x32xf32>
    %274 = vector.broadcast %273 : vector<1x32xf32> to vector<16x32xf32>
    %275 = arith.addf %272, %274 : vector<16x32xf32>
    %cst_106 = arith.constant 0.000000e+00 : f32
    %276 = vector.broadcast %cst_106 : f32 to vector<16x32xf32>
    %277 = arith.maximumf %275, %276 : vector<16x32xf32>
    %278 = vector.extract_strided_slice %45 {offsets = [0, 128], sizes = [2, 64], strides = [1, 1]} : vector<2x192xf32> to vector<2x64xf32>
    %279 = vector.extract_strided_slice %278 {offsets = [0, 0], sizes = [1, 64], strides = [1, 1]} : vector<2x64xf32> to vector<1x64xf32>
    %280 = vector.shape_cast %279 : vector<1x64xf32> to vector<1x64xf32>
    %281 = vector.broadcast %280 : vector<1x64xf32> to vector<8x64xf32>
    %282 = vector.extract_strided_slice %278 {offsets = [1, 0], sizes = [1, 64], strides = [1, 1]} : vector<2x64xf32> to vector<1x64xf32>
    %283 = vector.shape_cast %282 : vector<1x64xf32> to vector<1x64xf32>
    %284 = vector.broadcast %283 : vector<1x64xf32> to vector<8x64xf32>
    %285 = tpu.concatenate %281, %284 in 0 : vector<8x64xf32>, vector<8x64xf32> -> vector<16x64xf32>
    %286 = vector.extract_strided_slice %285 {offsets = [0, 0], sizes = [16, 32], strides = [1, 1]} : vector<16x64xf32> to vector<16x32xf32>
    %287 = arith.mulf %277, %286 : vector<16x32xf32>
    %288 = vector.extract_strided_slice %285 {offsets = [0, 32], sizes = [16, 32], strides = [1, 1]} : vector<16x64xf32> to vector<16x32xf32>
    %289 = arith.addf %287, %288 : vector<16x32xf32>
    %290 = vector.extract_strided_slice %289 {offsets = [0, 0], sizes = [1, 32], strides = [1, 1]} : vector<16x32xf32> to vector<1x32xf32>
    %291 = vector.extract_strided_slice %289 {offsets = [1, 0], sizes = [1, 32], strides = [1, 1]} : vector<16x32xf32> to vector<1x32xf32>
    %292 = vector.extract_strided_slice %289 {offsets = [2, 0], sizes = [1, 32], strides = [1, 1]} : vector<16x32xf32> to vector<1x32xf32>
    %293 = vector.extract_strided_slice %289 {offsets = [3, 0], sizes = [1, 32], strides = [1, 1]} : vector<16x32xf32> to vector<1x32xf32>
    %294 = vector.extract_strided_slice %289 {offsets = [4, 0], sizes = [1, 32], strides = [1, 1]} : vector<16x32xf32> to vector<1x32xf32>
    %295 = vector.extract_strided_slice %289 {offsets = [5, 0], sizes = [1, 32], strides = [1, 1]} : vector<16x32xf32> to vector<1x32xf32>
    %296 = vector.extract_strided_slice %289 {offsets = [6, 0], sizes = [1, 32], strides = [1, 1]} : vector<16x32xf32> to vector<1x32xf32>
    %297 = vector.extract_strided_slice %289 {offsets = [7, 0], sizes = [1, 32], strides = [1, 1]} : vector<16x32xf32> to vector<1x32xf32>
    %298 = tpu.concatenate %290, %291, %292, %293, %294, %295, %296, %297 in 1 : vector<1x32xf32>, vector<1x32xf32>, vector<1x32xf32>, vector<1x32xf32>, vector<1x32xf32>, vector<1x32xf32>, vector<1x32xf32>, vector<1x32xf32> -> vector<1x256xf32>
    %299 = vector.extract_strided_slice %289 {offsets = [8, 0], sizes = [1, 32], strides = [1, 1]} : vector<16x32xf32> to vector<1x32xf32>
    %300 = vector.extract_strided_slice %289 {offsets = [9, 0], sizes = [1, 32], strides = [1, 1]} : vector<16x32xf32> to vector<1x32xf32>
    %301 = vector.extract_strided_slice %289 {offsets = [10, 0], sizes = [1, 32], strides = [1, 1]} : vector<16x32xf32> to vector<1x32xf32>
    %302 = vector.extract_strided_slice %289 {offsets = [11, 0], sizes = [1, 32], strides = [1, 1]} : vector<16x32xf32> to vector<1x32xf32>
    %303 = vector.extract_strided_slice %289 {offsets = [12, 0], sizes = [1, 32], strides = [1, 1]} : vector<16x32xf32> to vector<1x32xf32>
    %304 = vector.extract_strided_slice %289 {offsets = [13, 0], sizes = [1, 32], strides = [1, 1]} : vector<16x32xf32> to vector<1x32xf32>
    %305 = vector.extract_strided_slice %289 {offsets = [14, 0], sizes = [1, 32], strides = [1, 1]} : vector<16x32xf32> to vector<1x32xf32>
    %306 = vector.extract_strided_slice %289 {offsets = [15, 0], sizes = [1, 32], strides = [1, 1]} : vector<16x32xf32> to vector<1x32xf32>
    %307 = tpu.concatenate %299, %300, %301, %302, %303, %304, %305, %306 in 1 : vector<1x32xf32>, vector<1x32xf32>, vector<1x32xf32>, vector<1x32xf32>, vector<1x32xf32>, vector<1x32xf32>, vector<1x32xf32>, vector<1x32xf32> -> vector<1x256xf32>
    %308 = tpu.concatenate %298, %307 in 0 : vector<1x256xf32>, vector<1x256xf32> -> vector<2x256xf32>
    %309 = vector.shape_cast %308 : vector<2x256xf32> to vector<1x2x256xf32>
    %c0_107 = arith.constant 0 : index
    %c0_108 = arith.constant 0 : index
    %c0_109 = arith.constant 0 : index
    %310 = vector.load %arg9[%c0_107, %c0_108, %c0_109] : memref<1x2x256xf32, #tpu.memory_space<vmem>>, vector<1x2x256xf32>
    tpu.vector_store %arg9[%c0_107, %c0_108, %c0_109], %309 {strides = array<i32>} : memref<1x2x256xf32, #tpu.memory_space<vmem>>, vector<1x2x256xf32>,
    return
  }
  func.func @transform_0(%arg0: i32) -> (i32, i32, i32) {
    %c0_i32 = arith.constant 0 : i32
    %c0_i32_0 = arith.constant 0 : i32
    %c0_i32_1 = arith.constant 0 : i32
    return %arg0, %c0_i32, %c0_i32_0 : i32, i32, i32
  }
  func.func @transform_1(%arg0: i32) -> (i32, i32, i32) {
    %c0_i32 = arith.constant 0 : i32
    %c0_i32_0 = arith.constant 0 : i32
    %c0_i32_1 = arith.constant 0 : i32
    return %arg0, %c0_i32, %c0_i32_0 : i32, i32, i32
  }
  func.func @transform_2(%arg0: i32) -> (i32, i32) {
    %c0_i32 = arith.constant 0 : i32
    %c0_i32_0 = arith.constant 0 : i32
    %c0_i32_1 = arith.constant 0 : i32
    return %c0_i32, %c0_i32_0 : i32, i32
  }
  func.func @transform_3(%arg0: i32) -> (i32, i32) {
    %c0_i32 = arith.constant 0 : i32
    %c0_i32_0 = arith.constant 0 : i32
    %c0_i32_1 = arith.constant 0 : i32
    return %c0_i32, %c0_i32_0 : i32, i32
  }
  func.func @transform_4(%arg0: i32) -> (i32, i32) {
    %c0_i32 = arith.constant 0 : i32
    %c0_i32_0 = arith.constant 0 : i32
    %c0_i32_1 = arith.constant 0 : i32
    return %c0_i32, %c0_i32_0 : i32, i32
  }
  func.func @transform_5(%arg0: i32) -> (i32, i32) {
    %c0_i32 = arith.constant 0 : i32
    %c0_i32_0 = arith.constant 0 : i32
    %c0_i32_1 = arith.constant 0 : i32
    return %c0_i32, %c0_i32_0 : i32, i32
  }
  func.func @transform_6(%arg0: i32) -> (i32, i32, i32) {
    %c0_i32 = arith.constant 0 : i32
    %c0_i32_0 = arith.constant 0 : i32
    %c0_i32_1 = arith.constant 0 : i32
    return %arg0, %c0_i32, %c0_i32_0 : i32, i32, i32
  }
  func.func @transform_7(%arg0: i32) -> (i32, i32, i32) {
    %c0_i32 = arith.constant 0 : i32
    %c0_i32_0 = arith.constant 0 : i32
    %c0_i32_1 = arith.constant 0 : i32
    return %arg0, %c0_i32, %c0_i32_0 : i32, i32, i32
  }
  func.func @transform_8(%arg0: i32) -> (i32, i32, i32) {
    %c0_i32 = arith.constant 0 : i32
    %c0_i32_0 = arith.constant 0 : i32
    %c0_i32_1 = arith.constant 0 : i32
    return %arg0, %c0_i32, %c0_i32_0 : i32, i32, i32
  }
}

</mosaic_0001>

<llo_original>
// kernel: tpu_custom_call.1
$region0: #{tpu_custom_call.1}
  #allocation0 [shape = 'u32[]', space=smem, size = 0x4, offset = 0x4, fixed_abs, tag = 'smem constant byte address 0x4 - core index']
  #allocation1 [shape = 'u32[72,128]{1,0:T(1,128)}', space=vmem, size = 0x9000, scoped, tag = 'internal scratch']
  %s0 = inlined_call_operand.vmem [shape: f32[1,16,16], index: 0, kind: input, shape index: {}]
  %s1 = inlined_call_operand.vmem [shape: f32[1,2,8], index: 1, kind: input, shape index: {}]
  %s2 = inlined_call_operand.vmem [shape: f32[432,32], index: 2, kind: input, shape index: {}]
  %s3 = inlined_call_operand.vmem [shape: f32[1,384], index: 3, kind: input, shape index: {}]
  %s4 = inlined_call_operand.vmem [shape: f32[8,192], index: 4, kind: input, shape index: {}]
  %s5 = inlined_call_operand.vmem [shape: f32[32,32], index: 5, kind: input, shape index: {}]
  %s6 = inlined_call_operand.hbm [shape: f32[1,2,256], index: 6, kind: output, shape index: {0}]
  %s7 = inlined_call_operand.hbm [shape: f32[1,2,256], index: 7, kind: output, shape index: {1}]
  %s8 = inlined_call_operand.hbm [shape: f32[1,2,256], index: 8, kind: output, shape index: {2}]
  %9 = xla_tuple %s6, %s7, %s8
  %s10 = sld [smem:[#allocation0]]
  $region50: #{tpu_custom_call.1} parent=0
    _
  %s12 = ssub.s32 1, %s10
  %s13 = scalar_select 0, %s12, %s10
  $region1: #{tpu_custom_call.1} parent=0
    #allocation2 [shape = 'u8[2048]{0}', space=vmem, size = 0x800, scoped, tag = 'output window, operand 0, single buffered']
    #allocation3 [shape = 's32[1]{0}', space=sflag, size = 0x4, scoped, tag = 'scoped memory for tpu_custom_call.1']
    #allocation4 [shape = 'u8[2048]{0}', space=vmem, size = 0x800, scoped, tag = 'output window, operand 1, single buffered']
    #allocation5 [shape = 's32[1]{0}', space=sflag, size = 0x4, scoped, tag = 'scoped memory for tpu_custom_call.1']
    #allocation6 [shape = 'u8[2048]{0}', space=vmem, size = 0x800, scoped, tag = 'output window, operand 2, single buffered']
    %14 = vsyncpa [#allocation3], 0
    %15 = vsyncpa [#allocation5], 0
    // Predicated region
    $region2: #{tpu_custom_call.1} parent=1 // pred_check
      _
    $region3: #{tpu_custom_call.1} parent=1 // pred_check_branch
      %17 = sbr.rel (0) target = $region5
    $region4: #{tpu_custom_call.1} parent=1 // pred_region
      _
    $region5: #{tpu_custom_call.1} parent=1 // pred_fallthru
      _
    // Predicated region
    $region6: #{tpu_custom_call.1} parent=1 // pred_check
      _
    $region7: #{tpu_custom_call.1} parent=1 // pred_check_branch
      %19 = sbr.rel (0) target = $region9
    $region8: #{tpu_custom_call.1} parent=1 // pred_region
      _
    $region9: #{tpu_custom_call.1} parent=1 // pred_fallthru
      _
    // Predicated region
    $region10: #{tpu_custom_call.1} parent=1 // pred_check
      _
    $region11: #{tpu_custom_call.1} parent=1 // pred_check_branch
      %21 = sbr.rel (0) target = $region13
    $region12: #{tpu_custom_call.1} parent=1 // pred_region
      _
    $region13: #{tpu_custom_call.1} parent=1 // pred_fallthru
      _
    // Predicated region
    $region14: #{tpu_custom_call.1} parent=1 // pred_check
      _
    $region15: #{tpu_custom_call.1} parent=1 // pred_check_branch
      %23 = sbr.rel (0) target = $region17
    $region16: #{tpu_custom_call.1} parent=1 // pred_region
      _
    $region17: #{tpu_custom_call.1} parent=1 // pred_fallthru
      _
    // Predicated region
    $region18: #{tpu_custom_call.1} parent=1 // pred_check
      _
    $region19: #{tpu_custom_call.1} parent=1 // pred_check_branch
      %25 = sbr.rel (0) target = $region21
    $region20: #{tpu_custom_call.1} parent=1 // pred_region
      _
    $region21: #{tpu_custom_call.1} parent=1 // pred_fallthru
      _
    // Predicated region
    $region22: #{tpu_custom_call.1} parent=1 // pred_check
      _
    $region23: #{tpu_custom_call.1} parent=1 // pred_check_branch
      %27 = sbr.rel (0) target = $region25
    $region24: #{tpu_custom_call.1} parent=1 // pred_region
      _
    $region25: #{tpu_custom_call.1} parent=1 // pred_fallthru
      _
    %v28 = vld [vmem:[%s0] sm:$0xff]
    %v29 = vld [vmem:[%s0 + $0x8] sm:$0xff]
    %v30 = vld [vmem:[%s1] sm:$0x3]
    %v31 = vlaneseq
    %v32 = vshrl.u32 %v31, 7
    %v33 = vadd.s32 %v32, 8
    %vm34 = vcmp.lt.s32.totalorder %v32, 0
    %v35 = vsub.s32 0, %v32
    %v36 = vsel %vm34, %v35, %v32
    %v37 = vshrl.u32 %v36, 3
    %v38 = vand.u32 %v36, 7
    %v39 = vsub.s32 0, %v38
    %v40 = vsel %vm34, %v39, %v38
    %vm41 = vcmp.lt.s32.totalorder %v33, 0
    %v42 = vsub.s32 0, %v33
    %v43 = vsel %vm41, %v42, %v33
    %v44 = vshrl.u32 %v43, 3
    %v45 = vand.u32 %v43, 7
    %v46 = vsub.s32 0, %v45
    %v47 = vsel %vm41, %v46, %v45
    %vm48 = vcmp.ne.s32.totalorder %v40, 0
    %vm49 = vcmp.ne.s32.totalorder %v47, 0
    %vm50 = vcmp.lt.s32.totalorder %v40, 0
    %vm51 = vcmp.lt.s32.totalorder %v47, 0
    %vm52 = vmand %vm50, %vm48
    %vm53 = vmand %vm51, %vm49
    %v54 = vadd.s32 %v40, 8
    %v55 = vadd.s32 %v47, 8
    %v56 = vsel %vm52, %v54, %v40
    %v57 = vsel %vm53, %v55, %v47
    %vm58 = vcmp.ne.s32.totalorder %v56, 0
    %vm59 = vcmp.ne.s32.totalorder %v57, 0
    %vm60 = vcmp.ne.s32.totalorder %v56, 7
    %vm61 = vcmp.ne.s32.totalorder %v57, 7
    %v62 = vld [vmem:[%s4] sm:$0xff]
    %v63 = vld [vmem:[%s4 + $0x8] sm:$0xff]
    %v64 = vld [vmem:[%s3 + $0x1] sm:$0x3]
    %v66 = vperm.slane %v64, 0
    %v67 = vperm.slane %v64, 1
    %68 = vrot.lane.b32.xlu0 %v66, 64
    %v69 = vpop.permute.xlu0 %68
    %70 = vrot.lane.b32.xlu0 %v67, 64
    %v71 = vpop.permute.xlu0 %70
    %vm72 = vcmask 523264
    %v73 = vsel %vm72, %v69, %v71
    %vm76 = vcmask 64512
    %v78 = vsel %vm76, %v30, 0
    %80 = vmatpush.msra.mxu0 0.0
    %81 = vmatpush.msra.mxu0 0.0
    %82 = vmatpush.msra.mxu0 0.0
    %83 = vmatpush.msra.mxu0 0.0
    %84 = vmatpush.msra.mxu0 0.0
    %85 = vmatpush.msra.mxu0 0.0
    %86 = vmatpush.msra.mxu0 0.0
    %87 = vmatpush.msra.mxu0 0.0
    %88 = vmatpush.msra.mxu0 0.0
    %89 = vmatpush.msra.mxu0 0.0
    %90 = vmatpush.msra.mxu0 0.0
    %91 = vmatpush.msra.mxu0 0.0
    %92 = vmatpush.msra.mxu0 0.0
    %93 = vmatpush.msra.mxu0 0.0
    %94 = vmatpush.msra.mxu0 0.0
    %95 = vmatpush.msra.mxu0 %v62
    %96 = vmatmul.f32.gmra.mxu0 %v78
    %v97 = vpop.f32.mrf.mxu0
    %v98 = vadd.f32 %v73, %v97
    %99 = vdwg.mxu0
    %100 = vmatpush.msra.mxu0 0.0
    %101 = vmatpush.msra.mxu0 0.0
    %102 = vmatpush.msra.mxu0 0.0
    %103 = vmatpush.msra.mxu0 0.0
    %104 = vmatpush.msra.mxu0 0.0
    %105 = vmatpush.msra.mxu0 0.0
    %106 = vmatpush.msra.mxu0 0.0
    %107 = vmatpush.msra.mxu0 0.0
    %108 = vmatpush.msra.mxu0 0.0
    %109 = vmatpush.msra.mxu0 0.0
    %110 = vmatpush.msra.mxu0 0.0
    %111 = vmatpush.msra.mxu0 0.0
    %112 = vmatpush.msra.mxu0 0.0
    %113 = vmatpush.msra.mxu0 0.0
    %114 = vmatpush.msra.mxu0 0.0
    %115 = vmatpush.msra.mxu0 %v63
    %116 = vmatmul.f32.gmra.mxu0 %v78
    %v117 = vpop.f32.mrf.mxu0
    %v118 = vadd.f32 %v71, %v117
    %119 = vdwg.mxu0
    %v120 = vld [vmem:[%s2] sm:$0xff]
    %v121 = vld [vmem:[%s2 + $0x8] sm:$0xff]
    %v122 = vld [vmem:[%s2 + $0x10] sm:$0xff]
    %v123 = vld [vmem:[%s2 + $0x18] sm:$0xff]
    %v124 = vld [vmem:[%s2 + $0x20] sm:$0xff]
    %v125 = vld [vmem:[%s2 + $0x28] sm:$0xff]
    %vm128 = vcmask 1040384
    %v129 = vrot.slane %v28, 7
    %v130 = vrot.slane %v29, 7
    %v131 = vsel %vm128, %v129, %v130
    %v134 = vsel %vm128, 0.0, %v129
    %v135 = vsel %vm58, 1, 0
    %v136 = vsel %vm59, 1, 0
    %vm137 = vcmp.eq.s32.totalorder %v135, 1
    %vm138 = vcmp.eq.s32.totalorder %v136, 1
    %v139 = vsel %vm137, %v134, 0.0
    %v140 = vsel %vm138, %v131, 0.0
    %vm141 = vcmask 130048
    %v142 = vsel %vm141, %v28, 0
    %v144 = vsel %vm141, %v29, 0
    %146 = vmatpush.msra.mxu0 0.0
    %147 = vmatpush.msra.mxu0 0.0
    %148 = vmatpush.msra.mxu0 0.0
    %149 = vmatpush.msra.mxu0 0.0
    %150 = vmatpush.msra.mxu0 0.0
    %151 = vmatpush.msra.mxu0 0.0
    %152 = vmatpush.msra.mxu0 0.0
    %153 = vmatpush.msra.mxu0 0.0
    %154 = vmatpush.msra.mxu0 0.0
    %155 = vmatpush.msra.mxu0 0.0
    %156 = vmatpush.msra.mxu0 0.0
    %157 = vmatpush.msra.mxu0 0.0
    %158 = vmatpush.msra.mxu0 0.0
    %159 = vmatpush.msra.mxu0 0.0
    %160 = vmatpush.msra.mxu0 %v123
    %161 = vmatpush.msra.mxu0 %v122
    %162 = vmatmul.f32.gmra.mxu0 %v142
    %v163 = vpop.f32.mrf.mxu0
    %v164 = vadd.f32 0.0, %v163
    %165 = vmatmul.f32.gmra.mxu0 %v144
    %v166 = vpop.f32.mrf.mxu0
    %v167 = vadd.f32 0.0, %v166
    %168 = vdwg.mxu0
    %v170 = vsel %vm141, %v139, 0
    %v173 = vsel %vm141, %v140, 0
    %175 = vmatpush.msra.mxu0 0.0
    %176 = vmatpush.msra.mxu0 0.0
    %177 = vmatpush.msra.mxu0 0.0
    %178 = vmatpush.msra.mxu0 0.0
    %179 = vmatpush.msra.mxu0 0.0
    %180 = vmatpush.msra.mxu0 0.0
    %181 = vmatpush.msra.mxu0 0.0
    %182 = vmatpush.msra.mxu0 0.0
    %183 = vmatpush.msra.mxu0 0.0
    %184 = vmatpush.msra.mxu0 0.0
    %185 = vmatpush.msra.mxu0 0.0
    %186 = vmatpush.msra.mxu0 0.0
    %187 = vmatpush.msra.mxu0 0.0
    %188 = vmatpush.msra.mxu0 0.0
    %189 = vmatpush.msra.mxu0 %v121
    %190 = vmatpush.msra.mxu0 %v120
    %191 = vmatmul.f32.gmra.mxu0 %v170
    %v192 = vpop.f32.mrf.mxu0
    %v193 = vadd.f32 %v164, %v192
    %194 = vmatmul.f32.gmra.mxu0 %v173
    %v195 = vpop.f32.mrf.mxu0
    %v196 = vadd.f32 %v167, %v195
    %197 = vdwg.mxu0
    %vm198 = vcmask 1046528
    %v199 = vrot.slane %v28, 1
    %v200 = vrot.slane %v29, 1
    %v201 = vsel %vm198, %v199, %v200
    %v204 = vsel %vm198, %v200, 0.0
    %v205 = vsel %vm60, 1, 0
    %v206 = vsel %vm61, 1, 0
    %vm207 = vcmp.eq.s32.totalorder %v205, 1
    %vm208 = vcmp.eq.s32.totalorder %v206, 1
    %v209 = vsel %vm207, %v201, 0.0
    %v210 = vsel %vm208, %v204, 0.0
    %v212 = vsel %vm141, %v209, 0
    %v215 = vsel %vm141, %v210, 0
    %217 = vmatpush.msra.mxu0 0.0
    %218 = vmatpush.msra.mxu0 0.0
    %219 = vmatpush.msra.mxu0 0.0
    %220 = vmatpush.msra.mxu0 0.0
    %221 = vmatpush.msra.mxu0 0.0
    %222 = vmatpush.msra.mxu0 0.0
    %223 = vmatpush.msra.mxu0 0.0
    %224 = vmatpush.msra.mxu0 0.0
    %225 = vmatpush.msra.mxu0 0.0
    %226 = vmatpush.msra.mxu0 0.0
    %227 = vmatpush.msra.mxu0 0.0
    %228 = vmatpush.msra.mxu0 0.0
    %229 = vmatpush.msra.mxu0 0.0
    %230 = vmatpush.msra.mxu0 0.0
    %231 = vmatpush.msra.mxu0 %v125
    %232 = vmatpush.msra.mxu0 %v124
    %233 = vmatmul.f32.gmra.mxu0 %v212
    %v234 = vpop.f32.mrf.mxu0
    %v235 = vadd.f32 0.0, %v234
    %236 = vmatmul.f32.gmra.mxu0 %v215
    %v237 = vpop.f32.mrf.mxu0
    %v238 = vadd.f32 0.0, %v237
    %239 = vdwg.mxu0
    %v240 = vadd.f32 %v193, %v235
    %v241 = vadd.f32 %v196, %v238
    %v242 = vld [vmem:[%s3] sm:$0x1]
    %v244 = vperm.slane %v242, 0
    %v246 = vadd.f32 %v240, %v244
    %v247 = vadd.f32 %v241, %v244
    %v248 = vmax.f32 %v246, 0.0
    %v249 = vmax.f32 %v247, 0.0
    %v250 = vld [vmem:[%s2 + $0x30] sm:$0xff]
    %v251 = vld [vmem:[%s2 + $0x38] sm:$0xff]
    %v252 = vld [vmem:[%s2 + $0x40] sm:$0xff]
    %v253 = vld [vmem:[%s2 + $0x48] sm:$0xff]
    %v254 = vld [vmem:[%s2 + $0x50] sm:$0xff]
    %v255 = vld [vmem:[%s2 + $0x58] sm:$0xff]
    %v256 = vld [vmem:[%s2 + $0x60] sm:$0xff]
    %v257 = vld [vmem:[%s2 + $0x68] sm:$0xff]
    %v258 = vld [vmem:[%s2 + $0x70] sm:$0xff]
    %v259 = vld [vmem:[%s2 + $0x78] sm:$0xff]
    %v260 = vld [vmem:[%s2 + $0x80] sm:$0xff]
    %v261 = vld [vmem:[%s2 + $0x88] sm:$0xff]
    %v264 = vrot.slane %v248, 7
    %v265 = vrot.slane %v249, 7
    %v266 = vsel %vm128, %v264, %v265
    %v269 = vsel %vm128, 0.0, %v264
    %v270 = vsel %vm137, %v269, 0.0
    %v271 = vsel %vm138, %v266, 0.0
    %vm272 = vcmask 261120
    %v273 = vsel %vm272, %v248, 0
    %v275 = vsel %vm272, %v249, 0
    %277 = vmatpush.msra.mxu0 0.0
    %278 = vmatpush.msra.mxu0 0.0
    %279 = vmatpush.msra.mxu0 0.0
    %280 = vmatpush.msra.mxu0 0.0
    %281 = vmatpush.msra.mxu0 0.0
    %282 = vmatpush.msra.mxu0 0.0
    %283 = vmatpush.msra.mxu0 0.0
    %284 = vmatpush.msra.mxu0 0.0
    %285 = vmatpush.msra.mxu0 0.0
    %286 = vmatpush.msra.mxu0 0.0
    %287 = vmatpush.msra.mxu0 0.0
    %288 = vmatpush.msra.mxu0 0.0
    %289 = vmatpush.msra.mxu0 %v257
    %290 = vmatpush.msra.mxu0 %v256
    %291 = vmatpush.msra.mxu0 %v255
    %292 = vmatpush.msra.mxu0 %v254
    %293 = vmatmul.f32.gmra.mxu0 %v273
    %v294 = vpop.f32.mrf.mxu0
    %v295 = vadd.f32 0.0, %v294
    %296 = vmatmul.f32.gmra.mxu0 %v275
    %v297 = vpop.f32.mrf.mxu0
    %v298 = vadd.f32 0.0, %v297
    %299 = vdwg.mxu0
    %v301 = vsel %vm272, %v270, 0
    %v304 = vsel %vm272, %v271, 0
    %306 = vmatpush.msra.mxu0 0.0
    %307 = vmatpush.msra.mxu0 0.0
    %308 = vmatpush.msra.mxu0 0.0
    %309 = vmatpush.msra.mxu0 0.0
    %310 = vmatpush.msra.mxu0 0.0
    %311 = vmatpush.msra.mxu0 0.0
    %312 = vmatpush.msra.mxu0 0.0
    %313 = vmatpush.msra.mxu0 0.0
    %314 = vmatpush.msra.mxu0 0.0
    %315 = vmatpush.msra.mxu0 0.0
    %316 = vmatpush.msra.mxu0 0.0
    %317 = vmatpush.msra.mxu0 0.0
    %318 = vmatpush.msra.mxu0 %v253
    %319 = vmatpush.msra.mxu0 %v252
    %320 = vmatpush.msra.mxu0 %v251
    %321 = vmatpush.msra.mxu0 %v250
    %322 = vmatmul.f32.gmra.mxu0 %v301
    %v323 = vpop.f32.mrf.mxu0
    %v324 = vadd.f32 %v295, %v323
    %325 = vmatmul.f32.gmra.mxu0 %v304
    %v326 = vpop.f32.mrf.mxu0
    %v327 = vadd.f32 %v298, %v326
    %328 = vdwg.mxu0
    %v329 = vrot.slane %v248, 1
    %v330 = vrot.slane %v249, 1
    %v331 = vsel %vm198, %v329, %v330
    %v334 = vsel %vm198, %v330, 0.0
    %v335 = vsel %vm207, %v331, 0.0
    %v336 = vsel %vm208, %v334, 0.0
    %v338 = vsel %vm272, %v335, 0
    %v341 = vsel %vm272, %v336, 0
    %343 = vmatpush.msra.mxu0 0.0
    %344 = vmatpush.msra.mxu0 0.0
    %345 = vmatpush.msra.mxu0 0.0
    %346 = vmatpush.msra.mxu0 0.0
    %347 = vmatpush.msra.mxu0 0.0
    %348 = vmatpush.msra.mxu0 0.0
    %349 = vmatpush.msra.mxu0 0.0
    %350 = vmatpush.msra.mxu0 0.0
    %351 = vmatpush.msra.mxu0 0.0
    %352 = vmatpush.msra.mxu0 0.0
    %353 = vmatpush.msra.mxu0 0.0
    %354 = vmatpush.msra.mxu0 0.0
    %355 = vmatpush.msra.mxu0 %v261
    %356 = vmatpush.msra.mxu0 %v260
    %357 = vmatpush.msra.mxu0 %v259
    %358 = vmatpush.msra.mxu0 %v258
    %359 = vmatmul.f32.gmra.mxu0 %v338
    %v360 = vpop.f32.mrf.mxu0
    %v361 = vadd.f32 0.0, %v360
    %362 = vmatmul.f32.gmra.mxu0 %v341
    %v363 = vpop.f32.mrf.mxu0
    %v364 = vadd.f32 0.0, %v363
    %365 = vdwg.mxu0
    %v366 = vadd.f32 %v324, %v361
    %v367 = vadd.f32 %v327, %v364
    %368 = vrot.lane.b32.xlu0 %v244, 96
    %v369 = vpop.permute.xlu0 %368
    %v371 = vadd.f32 %v366, %v369
    %v372 = vadd.f32 %v367, %v369
    %v373 = vmax.f32 %v371, 0.0
    %v374 = vmax.f32 %v372, 0.0
    %v375 = vperm.slane %v98, 0
    %v376 = vperm.slane %v98, 1
    %v377 = vmul.f32 %v373, %v375
    %v378 = vmul.f32 %v374, %v376
    %381 = vrot.lane.b32.xlu0 %v375, 96
    %v382 = vpop.permute.xlu0 %381
    %383 = vrot.lane.b32.xlu0 %v376, 96
    %v384 = vpop.permute.xlu0 %383
    %v387 = vadd.f32 %v377, %v382
    %v388 = vadd.f32 %v378, %v384
    %v390 = vrot.slane %v387, 1
    %391 = vrot.lane.b32.xlu0 %v390, 32
    %v392 = vpop.permute.xlu0 %391
    %v394 = vrot.slane %v387, 2
    %395 = vrot.lane.b32.xlu0 %v394, 64
    %v396 = vpop.permute.xlu0 %395
    %v398 = vrot.slane %v387, 3
    %399 = vrot.lane.b32.xlu0 %v398, 96
    %v400 = vpop.permute.xlu0 %399
    %v402 = vrot.slane %v387, 4
    %v404 = vrot.slane %v387, 5
    %405 = vrot.lane.b32.xlu0 %v404, 32
    %v406 = vpop.permute.xlu0 %405
    %v408 = vrot.slane %v387, 6
    %409 = vrot.lane.b32.xlu0 %v408, 64
    %v410 = vpop.permute.xlu0 %409
    %v412 = vrot.slane %v387, 7
    %413 = vrot.lane.b32.xlu0 %v412, 96
    %v414 = vpop.permute.xlu0 %413
    %v416 = vsel %vm272, %v387, %v392
    %v417 = vsel %vm72, %v416, %v396
    %vm418 = vcmask 785408
    %v419 = vsel %vm418, %v417, %v400
    %v420 = vsel %vm272, %v402, %v406
    %v421 = vsel %vm72, %v420, %v410
    %v422 = vsel %vm418, %v421, %v414
    %v424 = vrot.slane %v388, 1
    %425 = vrot.lane.b32.xlu0 %v424, 32
    %v426 = vpop.permute.xlu0 %425
    %v428 = vrot.slane %v388, 2
    %429 = vrot.lane.b32.xlu0 %v428, 64
    %v430 = vpop.permute.xlu0 %429
    %v432 = vrot.slane %v388, 3
    %433 = vrot.lane.b32.xlu0 %v432, 96
    %v434 = vpop.permute.xlu0 %433
    %v436 = vrot.slane %v388, 4
    %v438 = vrot.slane %v388, 5
    %439 = vrot.lane.b32.xlu0 %v438, 32
    %v440 = vpop.permute.xlu0 %439
    %v442 = vrot.slane %v388, 6
    %443 = vrot.lane.b32.xlu0 %v442, 64
    %v444 = vpop.permute.xlu0 %443
    %v446 = vrot.slane %v388, 7
    %447 = vrot.lane.b32.xlu0 %v446, 96
    %v448 = vpop.permute.xlu0 %447
    %v450 = vsel %vm272, %v388, %v426
    %v451 = vsel %vm72, %v450, %v430
    %v452 = vsel %vm418, %v451, %v434
    %v453 = vsel %vm272, %v436, %v440
    %v454 = vsel %vm72, %v453, %v444
    %v455 = vsel %vm418, %v454, %v448
    %v458 = vrot.slane %v452, 7
    %v459 = vrot.slane %v455, 7
    %v462 = vsel %vm128, %v419, %v458
    %v463 = vsel %vm128, %v422, %v459
    %v466 = vrot.slane %v463, 6
    %vm467 = vcmask 1041408
    %v468 = vsel %vm467, %v462, %v466
    %470 = vst [vmem:[#allocation2] sm:$0xf] %v468
    %v471 = vld [vmem:[%s5] sm:$0xff]
    %v472 = vld [vmem:[%s5 + $0x8] sm:$0xff]
    %v473 = vld [vmem:[%s5 + $0x10] sm:$0xff]
    %v474 = vld [vmem:[%s5 + $0x18] sm:$0xff]
    %v475 = vsel %vm272, %v387, 0
    %v477 = vsel %vm272, %v388, 0
    %479 = vmatpush.msra.mxu0 0.0
    %480 = vmatpush.msra.mxu0 0.0
    %481 = vmatpush.msra.mxu0 0.0
    %482 = vmatpush.msra.mxu0 0.0
    %483 = vmatpush.msra.mxu0 0.0
    %484 = vmatpush.msra.mxu0 0.0
    %485 = vmatpush.msra.mxu0 0.0
    %486 = vmatpush.msra.mxu0 0.0
    %487 = vmatpush.msra.mxu0 0.0
    %488 = vmatpush.msra.mxu0 0.0
    %489 = vmatpush.msra.mxu0 0.0
    %490 = vmatpush.msra.mxu0 0.0
    %491 = vmatpush.msra.mxu0 %v474
    %492 = vmatpush.msra.mxu0 %v473
    %493 = vmatpush.msra.mxu0 %v472
    %494 = vmatpush.msra.mxu0 %v471
    %495 = vmatmul.f32.gmra.mxu0 %v475
    %v496 = vpop.f32.mrf.mxu0
    %v497 = vadd.f32 0.0, %v496
    %498 = vmatmul.f32.gmra.mxu0 %v477
    %v499 = vpop.f32.mrf.mxu0
    %v500 = vadd.f32 0.0, %v499
    %501 = vdwg.mxu0
    %v502 = vld [vmem:[%s2 + $0x90] sm:$0xff]
    %v503 = vld [vmem:[%s2 + $0x98] sm:$0xff]
    %v504 = vld [vmem:[%s2 + $0xa0] sm:$0xff]
    %v505 = vld [vmem:[%s2 + $0xa8] sm:$0xff]
    %v506 = vld [vmem:[%s2 + $0xb0] sm:$0xff]
    %v507 = vld [vmem:[%s2 + $0xb8] sm:$0xff]
    %v510 = vrot.slane %v497, 7
    %v511 = vrot.slane %v500, 7
    %v512 = vsel %vm128, %v510, %v511
    %v515 = vsel %vm128, 0.0, %v510
    %v516 = vsel %vm137, %v515, 0.0
    %v517 = vsel %vm138, %v512, 0.0
    %v518 = vsel %vm141, %v497, 0
    %v520 = vsel %vm141, %v500, 0
    %522 = vmatpush.msra.mxu0 0.0
    %523 = vmatpush.msra.mxu0 0.0
    %524 = vmatpush.msra.mxu0 0.0
    %525 = vmatpush.msra.mxu0 0.0
    %526 = vmatpush.msra.mxu0 0.0
    %527 = vmatpush.msra.mxu0 0.0
    %528 = vmatpush.msra.mxu0 0.0
    %529 = vmatpush.msra.mxu0 0.0
    %530 = vmatpush.msra.mxu0 0.0
    %531 = vmatpush.msra.mxu0 0.0
    %532 = vmatpush.msra.mxu0 0.0
    %533 = vmatpush.msra.mxu0 0.0
    %534 = vmatpush.msra.mxu0 0.0
    %535 = vmatpush.msra.mxu0 0.0
    %536 = vmatpush.msra.mxu0 %v505
    %537 = vmatpush.msra.mxu0 %v504
    %538 = vmatmul.f32.gmra.mxu0 %v518
    %v539 = vpop.f32.mrf.mxu0
    %v540 = vadd.f32 0.0, %v539
    %541 = vmatmul.f32.gmra.mxu0 %v520
    %v542 = vpop.f32.mrf.mxu0
    %v543 = vadd.f32 0.0, %v542
    %544 = vdwg.mxu0
    %v546 = vsel %vm141, %v516, 0
    %v549 = vsel %vm141, %v517, 0
    %551 = vmatpush.msra.mxu0 0.0
    %552 = vmatpush.msra.mxu0 0.0
    %553 = vmatpush.msra.mxu0 0.0
    %554 = vmatpush.msra.mxu0 0.0
    %555 = vmatpush.msra.mxu0 0.0
    %556 = vmatpush.msra.mxu0 0.0
    %557 = vmatpush.msra.mxu0 0.0
    %558 = vmatpush.msra.mxu0 0.0
    %559 = vmatpush.msra.mxu0 0.0
    %560 = vmatpush.msra.mxu0 0.0
    %561 = vmatpush.msra.mxu0 0.0
    %562 = vmatpush.msra.mxu0 0.0
    %563 = vmatpush.msra.mxu0 0.0
    %564 = vmatpush.msra.mxu0 0.0
    %565 = vmatpush.msra.mxu0 %v503
    %566 = vmatpush.msra.mxu0 %v502
    %567 = vmatmul.f32.gmra.mxu0 %v546
    %v568 = vpop.f32.mrf.mxu0
    %v569 = vadd.f32 %v540, %v568
    %570 = vmatmul.f32.gmra.mxu0 %v549
    %v571 = vpop.f32.mrf.mxu0
    %v572 = vadd.f32 %v543, %v571
    %573 = vdwg.mxu0
    %v574 = vrot.slane %v497, 1
    %v575 = vrot.slane %v500, 1
    %v576 = vsel %vm198, %v574, %v575
    %v579 = vsel %vm198, %v575, 0.0
    %v580 = vsel %vm207, %v576, 0.0
    %v581 = vsel %vm208, %v579, 0.0
    %v583 = vsel %vm141, %v580, 0
    %v586 = vsel %vm141, %v581, 0
    %588 = vmatpush.msra.mxu0 0.0
    %589 = vmatpush.msra.mxu0 0.0
    %590 = vmatpush.msra.mxu0 0.0
    %591 = vmatpush.msra.mxu0 0.0
    %592 = vmatpush.msra.mxu0 0.0
    %593 = vmatpush.msra.mxu0 0.0
    %594 = vmatpush.msra.mxu0 0.0
    %595 = vmatpush.msra.mxu0 0.0
    %596 = vmatpush.msra.mxu0 0.0
    %597 = vmatpush.msra.mxu0 0.0
    %598 = vmatpush.msra.mxu0 0.0
    %599 = vmatpush.msra.mxu0 0.0
    %600 = vmatpush.msra.mxu0 0.0
    %601 = vmatpush.msra.mxu0 0.0
    %602 = vmatpush.msra.mxu0 %v507
    %603 = vmatpush.msra.mxu0 %v506
    %604 = vmatmul.f32.gmra.mxu0 %v583
    %v605 = vpop.f32.mrf.mxu0
    %v606 = vadd.f32 0.0, %v605
    %607 = vmatmul.f32.gmra.mxu0 %v586
    %v608 = vpop.f32.mrf.mxu0
    %v609 = vadd.f32 0.0, %v608
    %610 = vdwg.mxu0
    %v611 = vadd.f32 %v569, %v606
    %v612 = vadd.f32 %v572, %v609
    %v613 = vld [vmem:[%s3] sm:$0x1]
    %v615 = vperm.slane %v613, 0
    %616 = vrot.lane.b32.xlu0 %v615, 64
    %v617 = vpop.permute.xlu0 %616
    %v619 = vadd.f32 %v611, %v617
    %v620 = vadd.f32 %v612, %v617
    %v621 = vmax.f32 %v619, 0.0
    %v622 = vmax.f32 %v620, 0.0
    %v623 = vld [vmem:[%s2 + $0xc0] sm:$0xff]
    %v624 = vld [vmem:[%s2 + $0xc8] sm:$0xff]
    %v625 = vld [vmem:[%s2 + $0xd0] sm:$0xff]
    %v626 = vld [vmem:[%s2 + $0xd8] sm:$0xff]
    %v627 = vld [vmem:[%s2 + $0xe0] sm:$0xff]
    %v628 = vld [vmem:[%s2 + $0xe8] sm:$0xff]
    %v629 = vld [vmem:[%s2 + $0xf0] sm:$0xff]
    %v630 = vld [vmem:[%s2 + $0xf8] sm:$0xff]
    %v631 = vld [vmem:[%s2 + $0x100] sm:$0xff]
    %v632 = vld [vmem:[%s2 + $0x108] sm:$0xff]
    %v633 = vld [vmem:[%s2 + $0x110] sm:$0xff]
    %v634 = vld [vmem:[%s2 + $0x118] sm:$0xff]
    %v637 = vrot.slane %v621, 7
    %v638 = vrot.slane %v622, 7
    %v639 = vsel %vm128, %v637, %v638
    %v642 = vsel %vm128, 0.0, %v637
    %v643 = vsel %vm137, %v642, 0.0
    %v644 = vsel %vm138, %v639, 0.0
    %v645 = vsel %vm272, %v621, 0
    %v647 = vsel %vm272, %v622, 0
    %649 = vmatpush.msra.mxu0 0.0
    %650 = vmatpush.msra.mxu0 0.0
    %651 = vmatpush.msra.mxu0 0.0
    %652 = vmatpush.msra.mxu0 0.0
    %653 = vmatpush.msra.mxu0 0.0
    %654 = vmatpush.msra.mxu0 0.0
    %655 = vmatpush.msra.mxu0 0.0
    %656 = vmatpush.msra.mxu0 0.0
    %657 = vmatpush.msra.mxu0 0.0
    %658 = vmatpush.msra.mxu0 0.0
    %659 = vmatpush.msra.mxu0 0.0
    %660 = vmatpush.msra.mxu0 0.0
    %661 = vmatpush.msra.mxu0 %v630
    %662 = vmatpush.msra.mxu0 %v629
    %663 = vmatpush.msra.mxu0 %v628
    %664 = vmatpush.msra.mxu0 %v627
    %665 = vmatmul.f32.gmra.mxu0 %v645
    %v666 = vpop.f32.mrf.mxu0
    %v667 = vadd.f32 0.0, %v666
    %668 = vmatmul.f32.gmra.mxu0 %v647
    %v669 = vpop.f32.mrf.mxu0
    %v670 = vadd.f32 0.0, %v669
    %671 = vdwg.mxu0
    %v673 = vsel %vm272, %v643, 0
    %v676 = vsel %vm272, %v644, 0
    %678 = vmatpush.msra.mxu0 0.0
    %679 = vmatpush.msra.mxu0 0.0
    %680 = vmatpush.msra.mxu0 0.0
    %681 = vmatpush.msra.mxu0 0.0
    %682 = vmatpush.msra.mxu0 0.0
    %683 = vmatpush.msra.mxu0 0.0
    %684 = vmatpush.msra.mxu0 0.0
    %685 = vmatpush.msra.mxu0 0.0
    %686 = vmatpush.msra.mxu0 0.0
    %687 = vmatpush.msra.mxu0 0.0
    %688 = vmatpush.msra.mxu0 0.0
    %689 = vmatpush.msra.mxu0 0.0
    %690 = vmatpush.msra.mxu0 %v626
    %691 = vmatpush.msra.mxu0 %v625
    %692 = vmatpush.msra.mxu0 %v624
    %693 = vmatpush.msra.mxu0 %v623
    %694 = vmatmul.f32.gmra.mxu0 %v673
    %v695 = vpop.f32.mrf.mxu0
    %v696 = vadd.f32 %v667, %v695
    %697 = vmatmul.f32.gmra.mxu0 %v676
    %v698 = vpop.f32.mrf.mxu0
    %v699 = vadd.f32 %v670, %v698
    %700 = vdwg.mxu0
    %v701 = vrot.slane %v621, 1
    %v702 = vrot.slane %v622, 1
    %v703 = vsel %vm198, %v701, %v702
    %v706 = vsel %vm198, %v702, 0.0
    %v707 = vsel %vm207, %v703, 0.0
    %v708 = vsel %vm208, %v706, 0.0
    %v710 = vsel %vm272, %v707, 0
    %v713 = vsel %vm272, %v708, 0
    %715 = vmatpush.msra.mxu0 0.0
    %716 = vmatpush.msra.mxu0 0.0
    %717 = vmatpush.msra.mxu0 0.0
    %718 = vmatpush.msra.mxu0 0.0
    %719 = vmatpush.msra.mxu0 0.0
    %720 = vmatpush.msra.mxu0 0.0
    %721 = vmatpush.msra.mxu0 0.0
    %722 = vmatpush.msra.mxu0 0.0
    %723 = vmatpush.msra.mxu0 0.0
    %724 = vmatpush.msra.mxu0 0.0
    %725 = vmatpush.msra.mxu0 0.0
    %726 = vmatpush.msra.mxu0 0.0
    %727 = vmatpush.msra.mxu0 %v634
    %728 = vmatpush.msra.mxu0 %v633
    %729 = vmatpush.msra.mxu0 %v632
    %730 = vmatpush.msra.mxu0 %v631
    %731 = vmatmul.f32.gmra.mxu0 %v710
    %v732 = vpop.f32.mrf.mxu0
    %v733 = vadd.f32 0.0, %v732
    %734 = vmatmul.f32.gmra.mxu0 %v713
    %v735 = vpop.f32.mrf.mxu0
    %v736 = vadd.f32 0.0, %v735
    %737 = vdwg.mxu0
    %v738 = vadd.f32 %v696, %v733
    %v739 = vadd.f32 %v699, %v736
    %740 = vrot.lane.b32.xlu0 %v615, 32
    %v741 = vpop.permute.xlu0 %740
    %v743 = vadd.f32 %v738, %v741
    %v744 = vadd.f32 %v739, %v741
    %v745 = vmax.f32 %v743, 0.0
    %v746 = vmax.f32 %v744, 0.0
    %747 = vrot.lane.b32.xlu0 %v375, 64
    %v748 = vpop.permute.xlu0 %747
    %749 = vrot.lane.b32.xlu0 %v376, 64
    %v750 = vpop.permute.xlu0 %749
    %v753 = vmul.f32 %v745, %v748
    %v754 = vmul.f32 %v746, %v750
    %755 = vrot.lane.b32.xlu0 %v375, 32
    %v756 = vpop.permute.xlu0 %755
    %757 = vrot.lane.b32.xlu0 %v376, 32
    %v758 = vpop.permute.xlu0 %757
    %v761 = vadd.f32 %v753, %v756
    %v762 = vadd.f32 %v754, %v758
    %v764 = vrot.slane %v761, 1
    %765 = vrot.lane.b32.xlu0 %v764, 32
    %v766 = vpop.permute.xlu0 %765
    %v768 = vrot.slane %v761, 2
    %769 = vrot.lane.b32.xlu0 %v768, 64
    %v770 = vpop.permute.xlu0 %769
    %v772 = vrot.slane %v761, 3
    %773 = vrot.lane.b32.xlu0 %v772, 96
    %v774 = vpop.permute.xlu0 %773
    %v776 = vrot.slane %v761, 4
    %v778 = vrot.slane %v761, 5
    %779 = vrot.lane.b32.xlu0 %v778, 32
    %v780 = vpop.permute.xlu0 %779
    %v782 = vrot.slane %v761, 6
    %783 = vrot.lane.b32.xlu0 %v782, 64
    %v784 = vpop.permute.xlu0 %783
    %v786 = vrot.slane %v761, 7
    %787 = vrot.lane.b32.xlu0 %v786, 96
    %v788 = vpop.permute.xlu0 %787
    %v790 = vsel %vm272, %v761, %v766
    %v791 = vsel %vm72, %v790, %v770
    %v792 = vsel %vm418, %v791, %v774
    %v793 = vsel %vm272, %v776, %v780
    %v794 = vsel %vm72, %v793, %v784
    %v795 = vsel %vm418, %v794, %v788
    %v797 = vrot.slane %v762, 1
    %798 = vrot.lane.b32.xlu0 %v797, 32
    %v799 = vpop.permute.xlu0 %798
    %v801 = vrot.slane %v762, 2
    %802 = vrot.lane.b32.xlu0 %v801, 64
    %v803 = vpop.permute.xlu0 %802
    %v805 = vrot.slane %v762, 3
    %806 = vrot.lane.b32.xlu0 %v805, 96
    %v807 = vpop.permute.xlu0 %806
    %v809 = vrot.slane %v762, 4
    %v811 = vrot.slane %v762, 5
    %812 = vrot.lane.b32.xlu0 %v811, 32
    %v813 = vpop.permute.xlu0 %812
    %v815 = vrot.slane %v762, 6
    %816 = vrot.lane.b32.xlu0 %v815, 64
    %v817 = vpop.permute.xlu0 %816
    %v819 = vrot.slane %v762, 7
    %820 = vrot.lane.b32.xlu0 %v819, 96
    %v821 = vpop.permute.xlu0 %820
    %v823 = vsel %vm272, %v762, %v799
    %v824 = vsel %vm72, %v823, %v803
    %v825 = vsel %vm418, %v824, %v807
    %v826 = vsel %vm272, %v809, %v813
    %v827 = vsel %vm72, %v826, %v817
    %v828 = vsel %vm418, %v827, %v821
    %v831 = vrot.slane %v825, 7
    %v832 = vrot.slane %v828, 7
    %v835 = vsel %vm128, %v792, %v831
    %v836 = vsel %vm128, %v795, %v832
    %v839 = vrot.slane %v836, 6
    %v840 = vsel %vm467, %v835, %v839
    %842 = vst [vmem:[#allocation4] sm:$0xf] %v840
    %v843 = vld [vmem:[%s5] sm:$0xff]
    %v844 = vld [vmem:[%s5 + $0x8] sm:$0xff]
    %v845 = vld [vmem:[%s5 + $0x10] sm:$0xff]
    %v846 = vld [vmem:[%s5 + $0x18] sm:$0xff]
    %851 = vrot.lane.b32.xlu0 %v843, 112
    %v852 = vpop.permute.xlu0 %851
    %853 = vrot.lane.b32.xlu0 %v844, 112
    %v854 = vpop.permute.xlu0 %853
    %855 = vrot.lane.b32.xlu0 %v845, 112
    %v856 = vpop.permute.xlu0 %855
    %857 = vrot.lane.b32.xlu0 %v846, 112
    %v858 = vpop.permute.xlu0 %857
    %v863 = vsel %vm272, %v761, 0
    %v865 = vsel %vm272, %v762, 0
    %867 = vmatpush.msra.mxu0 0.0
    %868 = vmatpush.msra.mxu0 0.0
    %869 = vmatpush.msra.mxu0 0.0
    %870 = vmatpush.msra.mxu0 0.0
    %871 = vmatpush.msra.mxu0 0.0
    %872 = vmatpush.msra.mxu0 0.0
    %873 = vmatpush.msra.mxu0 0.0
    %874 = vmatpush.msra.mxu0 0.0
    %875 = vmatpush.msra.mxu0 0.0
    %876 = vmatpush.msra.mxu0 0.0
    %877 = vmatpush.msra.mxu0 0.0
    %878 = vmatpush.msra.mxu0 0.0
    %879 = vmatpush.msra.mxu0 %v858
    %880 = vmatpush.msra.mxu0 %v856
    %881 = vmatpush.msra.mxu0 %v854
    %882 = vmatpush.msra.mxu0 %v852
    %883 = vmatmul.f32.gmra.mxu0 %v863
    %v884 = vpop.f32.mrf.mxu0
    %v885 = vadd.f32 0.0, %v884
    %886 = vmatmul.f32.gmra.mxu0 %v865
    %v887 = vpop.f32.mrf.mxu0
    %v888 = vadd.f32 0.0, %v887
    %889 = vdwg.mxu0
    %v890 = vld [vmem:[%s2 + $0x120] sm:$0xff]
    %v891 = vld [vmem:[%s2 + $0x128] sm:$0xff]
    %v892 = vld [vmem:[%s2 + $0x130] sm:$0xff]
    %v893 = vld [vmem:[%s2 + $0x138] sm:$0xff]
    %v894 = vld [vmem:[%s2 + $0x140] sm:$0xff]
    %v895 = vld [vmem:[%s2 + $0x148] sm:$0xff]
    %v898 = vrot.slane %v885, 7
    %v899 = vrot.slane %v888, 7
    %v900 = vsel %vm128, %v898, %v899
    %v903 = vsel %vm128, 0.0, %v898
    %v904 = vsel %vm137, %v903, 0.0
    %v905 = vsel %vm138, %v900, 0.0
    %v906 = vsel %vm141, %v885, 0
    %v908 = vsel %vm141, %v888, 0
    %910 = vmatpush.msra.mxu0 0.0
    %911 = vmatpush.msra.mxu0 0.0
    %912 = vmatpush.msra.mxu0 0.0
    %913 = vmatpush.msra.mxu0 0.0
    %914 = vmatpush.msra.mxu0 0.0
    %915 = vmatpush.msra.mxu0 0.0
    %916 = vmatpush.msra.mxu0 0.0
    %917 = vmatpush.msra.mxu0 0.0
    %918 = vmatpush.msra.mxu0 0.0
    %919 = vmatpush.msra.mxu0 0.0
    %920 = vmatpush.msra.mxu0 0.0
    %921 = vmatpush.msra.mxu0 0.0
    %922 = vmatpush.msra.mxu0 0.0
    %923 = vmatpush.msra.mxu0 0.0
    %924 = vmatpush.msra.mxu0 %v893
    %925 = vmatpush.msra.mxu0 %v892
    %926 = vmatmul.f32.gmra.mxu0 %v906
    %v927 = vpop.f32.mrf.mxu0
    %v928 = vadd.f32 0.0, %v927
    %929 = vmatmul.f32.gmra.mxu0 %v908
    %v930 = vpop.f32.mrf.mxu0
    %v931 = vadd.f32 0.0, %v930
    %932 = vdwg.mxu0
    %v934 = vsel %vm141, %v904, 0
    %v937 = vsel %vm141, %v905, 0
    %939 = vmatpush.msra.mxu0 0.0
    %940 = vmatpush.msra.mxu0 0.0
    %941 = vmatpush.msra.mxu0 0.0
    %942 = vmatpush.msra.mxu0 0.0
    %943 = vmatpush.msra.mxu0 0.0
    %944 = vmatpush.msra.mxu0 0.0
    %945 = vmatpush.msra.mxu0 0.0
    %946 = vmatpush.msra.mxu0 0.0
    %947 = vmatpush.msra.mxu0 0.0
    %948 = vmatpush.msra.mxu0 0.0
    %949 = vmatpush.msra.mxu0 0.0
    %950 = vmatpush.msra.mxu0 0.0
    %951 = vmatpush.msra.mxu0 0.0
    %952 = vmatpush.msra.mxu0 0.0
    %953 = vmatpush.msra.mxu0 %v891
    %954 = vmatpush.msra.mxu0 %v890
    %955 = vmatmul.f32.gmra.mxu0 %v934
    %v956 = vpop.f32.mrf.mxu0
    %v957 = vadd.f32 %v928, %v956
    %958 = vmatmul.f32.gmra.mxu0 %v937
    %v959 = vpop.f32.mrf.mxu0
    %v960 = vadd.f32 %v931, %v959
    %961 = vdwg.mxu0
    %v962 = vrot.slane %v885, 1
    %v963 = vrot.slane %v888, 1
    %v964 = vsel %vm198, %v962, %v963
    %v967 = vsel %vm198, %v963, 0.0
    %v968 = vsel %vm207, %v964, 0.0
    %v969 = vsel %vm208, %v967, 0.0
    %v971 = vsel %vm141, %v968, 0
    %v974 = vsel %vm141, %v969, 0
    %976 = vmatpush.msra.mxu0 0.0
    %977 = vmatpush.msra.mxu0 0.0
    %978 = vmatpush.msra.mxu0 0.0
    %979 = vmatpush.msra.mxu0 0.0
    %980 = vmatpush.msra.mxu0 0.0
    %981 = vmatpush.msra.mxu0 0.0
    %982 = vmatpush.msra.mxu0 0.0
    %983 = vmatpush.msra.mxu0 0.0
    %984 = vmatpush.msra.mxu0 0.0
    %985 = vmatpush.msra.mxu0 0.0
    %986 = vmatpush.msra.mxu0 0.0
    %987 = vmatpush.msra.mxu0 0.0
    %988 = vmatpush.msra.mxu0 0.0
    %989 = vmatpush.msra.mxu0 0.0
    %990 = vmatpush.msra.mxu0 %v895
    %991 = vmatpush.msra.mxu0 %v894
    %992 = vmatmul.f32.gmra.mxu0 %v971
    %v993 = vpop.f32.mrf.mxu0
    %v994 = vadd.f32 0.0, %v993
    %995 = vmatmul.f32.gmra.mxu0 %v974
    %v996 = vpop.f32.mrf.mxu0
    %v997 = vadd.f32 0.0, %v996
    %998 = vdwg.mxu0
    %v999 = vadd.f32 %v957, %v994
    %v1000 = vadd.f32 %v960, %v997
    %v1001 = vld [vmem:[%s3 + $0x1] sm:$0x1]
    %v1003 = vperm.slane %v1001, 0
    %v1005 = vadd.f32 %v999, %v1003
    %v1006 = vadd.f32 %v1000, %v1003
    %v1007 = vmax.f32 %v1005, 0.0
    %v1008 = vmax.f32 %v1006, 0.0
    %v1009 = vld [vmem:[%s2 + $0x150] sm:$0xff]
    %v1010 = vld [vmem:[%s2 + $0x158] sm:$0xff]
    %v1011 = vld [vmem:[%s2 + $0x160] sm:$0xff]
    %v1012 = vld [vmem:[%s2 + $0x168] sm:$0xff]
    %v1013 = vld [vmem:[%s2 + $0x170] sm:$0xff]
    %v1014 = vld [vmem:[%s2 + $0x178] sm:$0xff]
    %v1015 = vld [vmem:[%s2 + $0x180] sm:$0xff]
    %v1016 = vld [vmem:[%s2 + $0x188] sm:$0xff]
    %v1017 = vld [vmem:[%s2 + $0x190] sm:$0xff]
    %v1018 = vld [vmem:[%s2 + $0x198] sm:$0xff]
    %v1019 = vld [vmem:[%s2 + $0x1a0] sm:$0xff]
    %v1020 = vld [vmem:[%s2 + $0x1a8] sm:$0xff]
    %v1023 = vrot.slane %v1007, 7
    %v1024 = vrot.slane %v1008, 7
    %v1025 = vsel %vm128, %v1023, %v1024
    %v1028 = vsel %vm128, 0.0, %v1023
    %v1029 = vsel %vm137, %v1028, 0.0
    %v1030 = vsel %vm138, %v1025, 0.0
    %v1031 = vsel %vm272, %v1007, 0
    %v1033 = vsel %vm272, %v1008, 0
    %1035 = vmatpush.msra.mxu0 0.0
    %1036 = vmatpush.msra.mxu0 0.0
    %1037 = vmatpush.msra.mxu0 0.0
    %1038 = vmatpush.msra.mxu0 0.0
    %1039 = vmatpush.msra.mxu0 0.0
    %1040 = vmatpush.msra.mxu0 0.0
    %1041 = vmatpush.msra.mxu0 0.0
    %1042 = vmatpush.msra.mxu0 0.0
    %1043 = vmatpush.msra.mxu0 0.0
    %1044 = vmatpush.msra.mxu0 0.0
    %1045 = vmatpush.msra.mxu0 0.0
    %1046 = vmatpush.msra.mxu0 0.0
    %1047 = vmatpush.msra.mxu0 %v1016
    %1048 = vmatpush.msra.mxu0 %v1015
    %1049 = vmatpush.msra.mxu0 %v1014
    %1050 = vmatpush.msra.mxu0 %v1013
    %1051 = vmatmul.f32.gmra.mxu0 %v1031
    %v1052 = vpop.f32.mrf.mxu0
    %v1053 = vadd.f32 0.0, %v1052
    %1054 = vmatmul.f32.gmra.mxu0 %v1033
    %v1055 = vpop.f32.mrf.mxu0
    %v1056 = vadd.f32 0.0, %v1055
    %1057 = vdwg.mxu0
    %v1059 = vsel %vm272, %v1029, 0
    %v1062 = vsel %vm272, %v1030, 0
    %1064 = vmatpush.msra.mxu0 0.0
    %1065 = vmatpush.msra.mxu0 0.0
    %1066 = vmatpush.msra.mxu0 0.0
    %1067 = vmatpush.msra.mxu0 0.0
    %1068 = vmatpush.msra.mxu0 0.0
    %1069 = vmatpush.msra.mxu0 0.0
    %1070 = vmatpush.msra.mxu0 0.0
    %1071 = vmatpush.msra.mxu0 0.0
    %1072 = vmatpush.msra.mxu0 0.0
    %1073 = vmatpush.msra.mxu0 0.0
    %1074 = vmatpush.msra.mxu0 0.0
    %1075 = vmatpush.msra.mxu0 0.0
    %1076 = vmatpush.msra.mxu0 %v1012
    %1077 = vmatpush.msra.mxu0 %v1011
    %1078 = vmatpush.msra.mxu0 %v1010
    %1079 = vmatpush.msra.mxu0 %v1009
    %1080 = vmatmul.f32.gmra.mxu0 %v1059
    %v1081 = vpop.f32.mrf.mxu0
    %v1082 = vadd.f32 %v1053, %v1081
    %1083 = vmatmul.f32.gmra.mxu0 %v1062
    %v1084 = vpop.f32.mrf.mxu0
    %v1085 = vadd.f32 %v1056, %v1084
    %1086 = vdwg.mxu0
    %v1087 = vrot.slane %v1007, 1
    %v1088 = vrot.slane %v1008, 1
    %v1089 = vsel %vm198, %v1087, %v1088
    %v1092 = vsel %vm198, %v1088, 0.0
    %v1093 = vsel %vm207, %v1089, 0.0
    %v1094 = vsel %vm208, %v1092, 0.0
    %v1096 = vsel %vm272, %v1093, 0
    %v1099 = vsel %vm272, %v1094, 0
    %1101 = vmatpush.msra.mxu0 0.0
    %1102 = vmatpush.msra.mxu0 0.0
    %1103 = vmatpush.msra.mxu0 0.0
    %1104 = vmatpush.msra.mxu0 0.0
    %1105 = vmatpush.msra.mxu0 0.0
    %1106 = vmatpush.msra.mxu0 0.0
    %1107 = vmatpush.msra.mxu0 0.0
    %1108 = vmatpush.msra.mxu0 0.0
    %1109 = vmatpush.msra.mxu0 0.0
    %1110 = vmatpush.msra.mxu0 0.0
    %1111 = vmatpush.msra.mxu0 0.0
    %1112 = vmatpush.msra.mxu0 0.0
    %1113 = vmatpush.msra.mxu0 %v1020
    %1114 = vmatpush.msra.mxu0 %v1019
    %1115 = vmatpush.msra.mxu0 %v1018
    %1116 = vmatpush.msra.mxu0 %v1017
    %1117 = vmatmul.f32.gmra.mxu0 %v1096
    %v1118 = vpop.f32.mrf.mxu0
    %v1119 = vadd.f32 0.0, %v1118
    %1120 = vmatmul.f32.gmra.mxu0 %v1099
    %v1121 = vpop.f32.mrf.mxu0
    %v1122 = vadd.f32 0.0, %v1121
    %1123 = vdwg.mxu0
    %v1124 = vadd.f32 %v1082, %v1119
    %v1125 = vadd.f32 %v1085, %v1122
    %1126 = vrot.lane.b32.xlu0 %v1003, 96
    %v1127 = vpop.permute.xlu0 %1126
    %v1129 = vadd.f32 %v1124, %v1127
    %v1130 = vadd.f32 %v1125, %v1127
    %v1131 = vmax.f32 %v1129, 0.0
    %v1132 = vmax.f32 %v1130, 0.0
    %v1133 = vperm.slane %v118, 0
    %v1134 = vperm.slane %v118, 1
    %v1135 = vmul.f32 %v1131, %v1133
    %v1136 = vmul.f32 %v1132, %v1134
    %1139 = vrot.lane.b32.xlu0 %v1133, 96
    %v1140 = vpop.permute.xlu0 %1139
    %1141 = vrot.lane.b32.xlu0 %v1134, 96
    %v1142 = vpop.permute.xlu0 %1141
    %v1145 = vadd.f32 %v1135, %v1140
    %v1146 = vadd.f32 %v1136, %v1142
    %v1148 = vrot.slane %v1145, 1
    %1149 = vrot.lane.b32.xlu0 %v1148, 32
    %v1150 = vpop.permute.xlu0 %1149
    %v1152 = vrot.slane %v1145, 2
    %1153 = vrot.lane.b32.xlu0 %v1152, 64
    %v1154 = vpop.permute.xlu0 %1153
    %v1156 = vrot.slane %v1145, 3
    %1157 = vrot.lane.b32.xlu0 %v1156, 96
    %v1158 = vpop.permute.xlu0 %1157
    %v1160 = vrot.slane %v1145, 4
    %v1162 = vrot.slane %v1145, 5
    %1163 = vrot.lane.b32.xlu0 %v1162, 32
    %v1164 = vpop.permute.xlu0 %1163
    %v1166 = vrot.slane %v1145, 6
    %1167 = vrot.lane.b32.xlu0 %v1166, 64
    %v1168 = vpop.permute.xlu0 %1167
    %v1170 = vrot.slane %v1145, 7
    %1171 = vrot.lane.b32.xlu0 %v1170, 96
    %v1172 = vpop.permute.xlu0 %1171
    %v1174 = vsel %vm272, %v1145, %v1150
    %v1175 = vsel %vm72, %v1174, %v1154
    %v1176 = vsel %vm418, %v1175, %v1158
    %v1177 = vsel %vm272, %v1160, %v1164
    %v1178 = vsel %vm72, %v1177, %v1168
    %v1179 = vsel %vm418, %v1178, %v1172
    %v1181 = vrot.slane %v1146, 1
    %1182 = vrot.lane.b32.xlu0 %v1181, 32
    %v1183 = vpop.permute.xlu0 %1182
    %v1185 = vrot.slane %v1146, 2
    %1186 = vrot.lane.b32.xlu0 %v1185, 64
    %v1187 = vpop.permute.xlu0 %1186
    %v1189 = vrot.slane %v1146, 3
    %1190 = vrot.lane.b32.xlu0 %v1189, 96
    %v1191 = vpop.permute.xlu0 %1190
    %v1193 = vrot.slane %v1146, 4
    %v1195 = vrot.slane %v1146, 5
    %1196 = vrot.lane.b32.xlu0 %v1195, 32
    %v1197 = vpop.permute.xlu0 %1196
    %v1199 = vrot.slane %v1146, 6
    %1200 = vrot.lane.b32.xlu0 %v1199, 64
    %v1201 = vpop.permute.xlu0 %1200
    %v1203 = vrot.slane %v1146, 7
    %1204 = vrot.lane.b32.xlu0 %v1203, 96
    %v1205 = vpop.permute.xlu0 %1204
    %v1207 = vsel %vm272, %v1146, %v1183
    %v1208 = vsel %vm72, %v1207, %v1187
    %v1209 = vsel %vm418, %v1208, %v1191
    %v1210 = vsel %vm272, %v1193, %v1197
    %v1211 = vsel %vm72, %v1210, %v1201
    %v1212 = vsel %vm418, %v1211, %v1205
    %v1215 = vrot.slane %v1209, 7
    %v1216 = vrot.slane %v1212, 7
    %v1219 = vsel %vm128, %v1176, %v1215
    %v1220 = vsel %vm128, %v1179, %v1216
    %v1223 = vrot.slane %v1220, 6
    %v1224 = vsel %vm467, %v1219, %v1223
    %1226 = vst [vmem:[#allocation6] sm:$0xf] %v1224
    // Predicated region
    $region26: #{tpu_custom_call.1} parent=1 // pred_check
      _
    $region27: #{tpu_custom_call.1} parent=1 // pred_check_branch
      %1228 = sbr.rel (0) target = $region29
    $region28: #{tpu_custom_call.1} parent=1 // pred_region
      %1230 = vsyncadd [#allocation3], 0
      %s1232 = sshll.u32 [#allocation2], 4
      %s1233 = int_to_ptr.vmem [resolvable:$true] %s1232
      %s1234 = sshll.u32 %s6, 4
      %s1235 = int_to_ptr.hbm [resolvable:$true] %s1234
      %1237 = dma.vmem_to_hbm [thread:$0]  %s1233, 64, %s1235, [#allocation3]
    $region29: #{tpu_custom_call.1} parent=1 // pred_fallthru
      _
    // Predicated region
    $region30: #{tpu_custom_call.1} parent=1 // pred_check
      _
    $region31: #{tpu_custom_call.1} parent=1 // pred_check_branch
      %1239 = sbr.rel (0) target = $region33
    $region32: #{tpu_custom_call.1} parent=1 // pred_region
      %1241 = vsyncadd [#allocation5], 0
      %s1243 = sshll.u32 [#allocation4], 4
      %s1244 = int_to_ptr.vmem [resolvable:$true] %s1243
      %s1245 = sshll.u32 %s7, 4
      %s1246 = int_to_ptr.hbm [resolvable:$true] %s1245
      %1248 = dma.vmem_to_hbm [thread:$0]  %s1244, 64, %s1246, [#allocation5]
    $region33: #{tpu_custom_call.1} parent=1 // pred_fallthru
      _
    // Predicated region
    $region34: #{tpu_custom_call.1} parent=1 // pred_check
      _
    $region35: #{tpu_custom_call.1} parent=1 // pred_check_branch
      %1250 = sbr.rel (0) target = $region37
    $region36: #{tpu_custom_call.1} parent=1 // pred_region
      %1252 = vsyncadd [#allocation5], 0
      %s1254 = sshll.u32 [#allocation6], 4
      %s1255 = int_to_ptr.vmem [resolvable:$true] %s1254
      %s1256 = sshll.u32 %s8, 4
      %s1257 = int_to_ptr.hbm [resolvable:$true] %s1256
      %1259 = dma.vmem_to_hbm [thread:$0]  %s1255, 64, %s1257, [#allocation5]
    $region37: #{tpu_custom_call.1} parent=1 // pred_fallthru
      _
    // Predicated region
    $region38: #{tpu_custom_call.1} parent=1 // pred_check
      _
    $region39: #{tpu_custom_call.1} parent=1 // pred_check_branch
      %1261 = sbr.rel (0) target = $region41
    $region40: #{tpu_custom_call.1} parent=1 // pred_region
      %1263 = dma.done [#allocation3], 64
    $region41: #{tpu_custom_call.1} parent=1 // pred_fallthru
      _
    // Predicated region
    $region42: #{tpu_custom_call.1} parent=1 // pred_check
      _
    $region43: #{tpu_custom_call.1} parent=1 // pred_check_branch
      %1265 = sbr.rel (0) target = $region45
    $region44: #{tpu_custom_call.1} parent=1 // pred_region
      %1267 = dma.done [#allocation5], 64
    $region45: #{tpu_custom_call.1} parent=1 // pred_fallthru
      _
    // Predicated region
    $region46: #{tpu_custom_call.1} parent=1 // pred_check
      _
    $region47: #{tpu_custom_call.1} parent=1 // pred_check_branch
      %1269 = sbr.rel (0) target = $region49
    $region48: #{tpu_custom_call.1} parent=1 // pred_region
      %1271 = dma.done [#allocation5], 64
    $region49: #{tpu_custom_call.1} parent=1 // pred_fallthru
      _
    %1272 = vsyncpa [#allocation3], 1
    %1273 = vsyncpa [#allocation5], 1

</llo_original>
